<compile_context>
chip_gen: v6e
topology: v6e:2x2x1
jax: 0.10.0
libtpu: 0.0.40
codegen_flags: <defaults>
</compile_context>

<pallas_src>
import jax
import jax.numpy as jnp
import numpy as np
from jax import lax
from jax.experimental import pallas as pl
from jax.experimental.pallas import tpu as pltpu

N, CIN, COUT, H, W = 2, 4, 8, 16, 16
DILS = (6, 12, 18)
# Max padding actually needed after the d=18 center-tap simplification.
PAD = 12
HP, WP = H + 2 * PAD, W + 2 * PAD
EPS = 1e-5

M = N * H            # matmul M dim (batch folded in)      = 32
WC = W * CIN         # lane-packed input row width          = 64
WO = W * COUT        # lane-packed output row width         = 128
KD = 9 * WC          # im2col K of a dilated 3x3 branch     = 576


# ----------------------------- Pallas kernel --------------------------------
def aspp_kernel(lhs_c_ref, lhs_d6_ref, lhs_d12_ref, rhs14_ref, rhs6_ref,
                rhs12_ref, wpool_ref, rhs_head_ref, rhs_h5_ref, out_ref):
    # lhs_c_ref   : (N, H, W*CIN)  bf16  center tap (= the un-padded input)
    # lhs_d6/d12  : (M, 9*W*CIN)   bf16  wrapper-built im2col for d=6 / d=12
    # rhs*        : BN-folded block-diagonal weights, bf16 (see pack_params)
    f32, bf16 = jnp.float32, jnp.bfloat16

    center = lhs_c_ref[...].reshape(M, WC)        # free leading-dim merge

    # Branches 1 & 4 fused along output lanes (d=18 is center-only at H=W=16):
    # one (32,64)@(64,256) matmul -> [y1 | y4].
    y14 = jnp.maximum(jnp.dot(center, rhs14_ref[...],
                              preferred_element_type=f32), 0.0)

    # Branches 2 & 3 (d=6, d=12): one matmul each on the pre-built im2col LHS.
    y2 = jnp.maximum(jnp.dot(lhs_d6_ref[...], rhs6_ref[...],
                             preferred_element_type=f32), 0.0)
    y3 = jnp.maximum(jnp.dot(lhs_d12_ref[...], rhs12_ref[...],
                             preferred_element_type=f32), 0.0)

    # Branch 5: global average pool.  The 1/(H*W) scale and the broadcast over
    # the W lane groups are folded into wpool, so only an f32 row-sum remains.
    pooled = jnp.sum(lhs_c_ref[...].astype(f32), axis=1)           # (N, WC)
    y5 = jnp.maximum(jnp.dot(pooled.astype(bf16), wpool_ref[...],
                             preferred_element_type=f32), 0.0)     # (N, WO)

    # Output head.  Branch activations stay f32 until this single bf16 cast.
    # y_cat chunks land at 128-aligned lane offsets -> tile-aligned concat;
    # rhs_head row blocks are ordered to match [y1 | y4 | y2 | y3].
    y_cat = jnp.concatenate([y14, y2, y3], axis=-1).astype(bf16)   # (32, 512)
    head = jnp.dot(y_cat, rhs_head_ref[...],
                   preferred_element_type=f32)                     # (32, WO)
    # Branch 5 folded into the head: tiny (N,WO)@(WO,WO) matmul broadcast-added
    # over H (bilinear upsampling of a 1x1 map with align_corners=True is a
    # pure broadcast).  Dropout(0.5) is identity in eval mode.
    head5 = jnp.dot(y5.astype(bf16), rhs_h5_ref[...],
                    preferred_element_type=f32)                    # (N, WO)
    out = head.reshape(N, H, WO) + head5.reshape(N, 1, WO)
    out_ref[...] = jnp.maximum(out, 0.0)                           # (N, H, WO)


# ------------------------------ JAX wrapper ---------------------------------
def aspp_forward(x, packed):
    # Lane-dense bf16 im2col built in XLA (layout plumbing).  The previous
    # version's in-kernel tap slices were lane-unaligned and XLU-bound; the
    # extra ~150 KiB of HBM traffic from hoisting them here is negligible.
    xb = x.astype(jnp.bfloat16)
    xpad = jnp.pad(xb, ((0, 0), (PAD, PAD), (PAD, PAD), (0, 0)))

    def tap(r0, c0):
        return xpad[:, r0:r0 + H, c0:c0 + W, :].reshape(M, WC)

    def im2col(d):
        offs = (PAD - d, PAD, PAD + d)
        return jnp.concatenate([tap(r, c) for r in offs for c in offs],
                               axis=-1)                            # (M, 576)

    lhs_c = xb.reshape(N, H, WC)                 # center tap + pooling source
    lhs_d6, lhs_d12 = im2col(DILS[0]), im2col(DILS[1])

    # Single grid-less invocation: all operands are whole-array VMEM residents
    # (~0.6 MiB total); per-grid-step overhead would dominate at this size.
    # TODO(synk): at production ASPP sizes (CIN~2048, H=W~65) this must become
    # a gridded kernel (row/K tiling, vmem_limit_bytes, Buffered specs, and a
    # parallel axis so v7x's second TensorCore is used).
    inputs = (lhs_c, lhs_d6, lhs_d12) + tuple(packed)
    out3d = pl.pallas_call(
        aspp_kernel,
        out_shape=jax.ShapeDtypeStruct((N, H, WO), jnp.float32),
        in_specs=[pl.BlockSpec(memory_space=pltpu.MemorySpace.VMEM)
                  for _ in inputs],
        out_specs=pl.BlockSpec(memory_space=pltpu.MemorySpace.VMEM),
    )(*inputs)
    return out3d.reshape(N, H, W, COUT)


# --------------------------- parameter construction -------------------------
def kaiming_normal(key, shape, fan_in):
    std = (2.0 / fan_in) ** 0.5          # PyTorch kaiming_normal_ default gain
    return std * jax.random.normal(key, shape, jnp.float32)


def pack_params(raw):
    """Fold BatchNorm (eval stats) and repack the conv weights into lane-dense
    block-diagonal matrices so every conv is a single matmul in the
    (N*H, W*C) layout used by the kernel."""
    w1, w2, w3, w4, wp, wo = raw
    scale = 1.0 / np.sqrt(1.0 + EPS)     # BN: gamma=1, beta=0, mean=0, var=1
    eye_w = jnp.eye(W, dtype=jnp.float32)

    def bd(m):        # (Ci, Co) -> (W*Ci, W*Co): m on every w-diagonal block
        return jnp.kron(eye_w, m * scale)

    def dil_rhs(wk):  # (3, 3, CIN, COUT) -> (9*W*CIN, W*COUT), tap-stacked
        return jnp.concatenate(
            [bd(wk[i, j]) for i in range(3) for j in range(3)], axis=0)

    # Branches 1 & 4 fused along output lanes; d=18 reduces to its center
    # weight because H=W=16 < 18 (all other taps see only zero padding).
    rhs14 = jnp.concatenate([bd(w1), bd(w4[1, 1])], axis=1)       # (64, 256)
    rhs6, rhs12 = dil_rhs(w2), dil_rhs(w3)                        # (576, 128)
    # Pooling branch: 1/(H*W) mean and the broadcast over the W lane groups
    # folded directly into the weight -> (W*CIN, W*COUT).
    wpool = jnp.tile(wp * (scale / (H * W)), (W, W))              # (64, 128)
    # Output head: row blocks ordered to match the kernel's [y1 | y4 | y2 | y3]
    # lane concat; the y5 block is applied separately (broadcast-add).
    blk = [wo[k * COUT:(k + 1) * COUT] for k in range(5)]
    rhs_head = jnp.concatenate(
        [bd(blk[0]), bd(blk[3]), bd(blk[1]), bd(blk[2])], axis=0)  # (512, 128)
    rhs_h5 = bd(blk[4])                                            # (128, 128)

    cast = lambda a: a.astype(jnp.bfloat16)  # native MXU operand dtype
    return tuple(map(cast, (rhs14, rhs6, rhs12, wpool, rhs_head, rhs_h5)))


def make_params(key):
    ks = jax.random.split(key, 6)
    w1 = kaiming_normal(ks[0], (CIN, COUT), CIN)             # 1x1
    w2 = kaiming_normal(ks[1], (3, 3, CIN, COUT), CIN * 9)   # 3x3 dil 6
    w3 = kaiming_normal(ks[2], (3, 3, CIN, COUT), CIN * 9)   # 3x3 dil 12
    w4 = kaiming_normal(ks[3], (3, 3, CIN, COUT), CIN * 9)   # 3x3 dil 18
    wp = kaiming_normal(ks[4], (CIN, COUT), CIN)             # pooling 1x1
    wo = kaiming_normal(ks[5], (5 * COUT, COUT), 5 * COUT)   # output 1x1
    raw = (w1, w2, w3, w4, wp, wo)
    return raw, pack_params(raw)


# ------------------------------ pure-JAX reference --------------------------
def aspp_reference(x, raw):
    w1, w2, w3, w4, wp, wo = raw

    def conv(inp, w_hwio, dil, pad):
        return lax.conv_general_dilated(
            inp, w_hwio, (1, 1), [(pad, pad), (pad, pad)],
            rhs_dilation=(dil, dil),
            dimension_numbers=("NHWC", "HWIO", "NHWC"),
            precision=lax.Precision.HIGHEST)

    def bn_relu(y):
        return jnp.maximum(y / jnp.sqrt(1.0 + EPS), 0.0)

    y1 = bn_relu(conv(x, w1.reshape(1, 1, CIN, COUT), 1, 0))
    y2 = bn_relu(conv(x, w2, DILS[0], DILS[0]))
    y3 = bn_relu(conv(x, w3, DILS[1], DILS[1]))
    y4 = bn_relu(conv(x, w4, DILS[2], DILS[2]))
    xm = jnp.mean(x, axis=(1, 2), keepdims=True)              # (N,1,1,CIN)
    y5 = bn_relu(conv(xm, wp.reshape(1, 1, CIN, COUT), 1, 0))
    y5 = jnp.broadcast_to(y5, (N, H, W, COUT))                 # bilinear of 1x1
    cat = jnp.concatenate([y1, y2, y3, y4, y5], axis=-1)
    out = bn_relu(conv(cat, wo.reshape(1, 1, 5 * COUT, COUT), 1, 0))
    return out                                                 # dropout = id


# ---------------------------------- main -------------------------------------
if __name__ == "__main__":
    key = jax.random.PRNGKey(0)
    kx, kw = jax.random.split(key)
    x = jax.random.normal(kx, (N, H, W, CIN), jnp.float32)
    raw, packed = make_params(kw)

    out = jax.block_until_ready(aspp_forward(x, packed))
    ref = jax.block_until_ready(aspp_reference(x, raw))

    assert out.shape == (N, H, W, COUT), out.shape
    max_err = float(jnp.max(jnp.abs(out - ref)))
    # bf16 MXU operands with f32 accumulation vs a Precision.HIGHEST f32
    # reference (branch activations now stay f32 until the head matmul).
    ok = bool(jnp.allclose(out, ref, atol=3e-2, rtol=3e-2))
    assert ok, f"mismatch vs reference: max abs err = {max_err}"
    print("KERNEL_OK")
</pallas_src>

<mosaic_0001>
module attributes {stable_mosaic.version = 11 : i64} {
  func.func @aspp_kernel(%arg0: memref<2x16x64xbf16, #tpu.memory_space<vmem>>, %arg1: memref<32x576xbf16, #tpu.memory_space<vmem>>, %arg2: memref<32x576xbf16, #tpu.memory_space<vmem>>, %arg3: memref<64x256xbf16, #tpu.memory_space<vmem>>, %arg4: memref<576x128xbf16, #tpu.memory_space<vmem>>, %arg5: memref<576x128xbf16, #tpu.memory_space<vmem>>, %arg6: memref<64x128xbf16, #tpu.memory_space<vmem>>, %arg7: memref<512x128xbf16, #tpu.memory_space<vmem>>, %arg8: memref<128x128xbf16, #tpu.memory_space<vmem>>, %arg9: memref<2x16x128xf32, #tpu.memory_space<vmem>>) attributes {dimension_semantics = [], scalar_prefetch = 0 : i64, scratch_operands = 0 : i64, tpu.core_type = #tpu.core_type<tc>} {
    %c0 = arith.constant 0 : index
    %c0_0 = arith.constant 0 : index
    %c0_1 = arith.constant 0 : index
    %0 = vector.load %arg0[%c0, %c0_0, %c0_1] : memref<2x16x64xbf16, #tpu.memory_space<vmem>>, vector<2x16x64xbf16>
    %1 = vector.shape_cast %0 : vector<2x16x64xbf16> to vector<32x64xbf16>
    %c0_2 = arith.constant 0 : index
    %c0_3 = arith.constant 0 : index
    %2 = vector.load %arg3[%c0_2, %c0_3] : memref<64x256xbf16, #tpu.memory_space<vmem>>, vector<64x256xbf16>
    %cst = arith.constant dense<0.000000e+00> : vector<32x256xf32>
    %3 = tpu.matmul %1, %2, %cst {dimension_numbers = #tpu.dot_dimension_numbers<[1], [0], [0], [1], [0, 0, 1, 1], [], []>} : vector<32x64xbf16>, vector<64x256xbf16>, vector<32x256xf32> -> vector<32x256xf32>
    %cst_4 = arith.constant 0.000000e+00 : f32
    %4 = vector.broadcast %cst_4 : f32 to vector<32x256xf32>
    %5 = arith.maximumf %3, %4 : vector<32x256xf32>
    %c0_5 = arith.constant 0 : index
    %c0_6 = arith.constant 0 : index
    %6 = vector.load %arg1[%c0_5, %c0_6] : memref<32x576xbf16, #tpu.memory_space<vmem>>, vector<32x576xbf16>
    %c0_7 = arith.constant 0 : index
    %c0_8 = arith.constant 0 : index
    %7 = vector.load %arg4[%c0_7, %c0_8] : memref<576x128xbf16, #tpu.memory_space<vmem>>, vector<576x128xbf16>
    %cst_9 = arith.constant dense<0.000000e+00> : vector<32x128xf32>
    %8 = tpu.matmul %6, %7, %cst_9 {dimension_numbers = #tpu.dot_dimension_numbers<[1], [0], [0], [1], [0, 0, 1, 1], [], []>} : vector<32x576xbf16>, vector<576x128xbf16>, vector<32x128xf32> -> vector<32x128xf32>
    %cst_10 = arith.constant 0.000000e+00 : f32
    %9 = vector.broadcast %cst_10 : f32 to vector<32x128xf32>
    %10 = arith.maximumf %8, %9 : vector<32x128xf32>
    %c0_11 = arith.constant 0 : index
    %c0_12 = arith.constant 0 : index
    %11 = vector.load %arg2[%c0_11, %c0_12] : memref<32x576xbf16, #tpu.memory_space<vmem>>, vector<32x576xbf16>
    %c0_13 = arith.constant 0 : index
    %c0_14 = arith.constant 0 : index
    %12 = vector.load %arg5[%c0_13, %c0_14] : memref<576x128xbf16, #tpu.memory_space<vmem>>, vector<576x128xbf16>
    %cst_15 = arith.constant dense<0.000000e+00> : vector<32x128xf32>
    %13 = tpu.matmul %11, %12, %cst_15 {dimension_numbers = #tpu.dot_dimension_numbers<[1], [0], [0], [1], [0, 0, 1, 1], [], []>} : vector<32x576xbf16>, vector<576x128xbf16>, vector<32x128xf32> -> vector<32x128xf32>
    %cst_16 = arith.constant 0.000000e+00 : f32
    %14 = vector.broadcast %cst_16 : f32 to vector<32x128xf32>
    %15 = arith.maximumf %13, %14 : vector<32x128xf32>
    %c0_17 = arith.constant 0 : index
    %c0_18 = arith.constant 0 : index
    %c0_19 = arith.constant 0 : index
    %16 = vector.load %arg0[%c0_17, %c0_18, %c0_19] : memref<2x16x64xbf16, #tpu.memory_space<vmem>>, vector<2x16x64xbf16>
    %17 = arith.extf %16 : vector<2x16x64xbf16> to vector<2x16x64xf32>
    %cst_20 = arith.constant dense<0.000000e+00> : vector<2x64xf32>
    %18 = vector.multi_reduction <add>, %17, %cst_20 [1] : vector<2x16x64xf32> to vector<2x64xf32>
    %19 = arith.truncf %18 : vector<2x64xf32> to vector<2x64xbf16>
    %c0_21 = arith.constant 0 : index
    %c0_22 = arith.constant 0 : index
    %20 = vector.load %arg6[%c0_21, %c0_22] : memref<64x128xbf16, #tpu.memory_space<vmem>>, vector<64x128xbf16>
    %cst_23 = arith.constant dense<0.000000e+00> : vector<2x128xf32>
    %21 = tpu.matmul %19, %20, %cst_23 {dimension_numbers = #tpu.dot_dimension_numbers<[1], [0], [0], [1], [0, 0, 1, 1], [], []>} : vector<2x64xbf16>, vector<64x128xbf16>, vector<2x128xf32> -> vector<2x128xf32>
    %cst_24 = arith.constant 0.000000e+00 : f32
    %22 = vector.broadcast %cst_24 : f32 to vector<2x128xf32>
    %23 = arith.maximumf %21, %22 : vector<2x128xf32>
    %24 = tpu.concatenate %5, %10, %15 in 1 : vector<32x256xf32>, vector<32x128xf32>, vector<32x128xf32> -> vector<32x512xf32>
    %25 = arith.truncf %24 : vector<32x512xf32> to vector<32x512xbf16>
    %c0_25 = arith.constant 0 : index
    %c0_26 = arith.constant 0 : index
    %26 = vector.load %arg7[%c0_25, %c0_26] : memref<512x128xbf16, #tpu.memory_space<vmem>>, vector<512x128xbf16>
    %cst_27 = arith.constant dense<0.000000e+00> : vector<32x128xf32>
    %27 = tpu.matmul %25, %26, %cst_27 {dimension_numbers = #tpu.dot_dimension_numbers<[1], [0], [0], [1], [0, 0, 1, 1], [], []>} : vector<32x512xbf16>, vector<512x128xbf16>, vector<32x128xf32> -> vector<32x128xf32>
    %28 = arith.truncf %23 : vector<2x128xf32> to vector<2x128xbf16>
    %c0_28 = arith.constant 0 : index
    %c0_29 = arith.constant 0 : index
    %29 = vector.load %arg8[%c0_28, %c0_29] : memref<128x128xbf16, #tpu.memory_space<vmem>>, vector<128x128xbf16>
    %cst_30 = arith.constant dense<0.000000e+00> : vector<2x128xf32>
    %30 = tpu.matmul %28, %29, %cst_30 {dimension_numbers = #tpu.dot_dimension_numbers<[1], [0], [0], [1], [0, 0, 1, 1], [], []>} : vector<2x128xbf16>, vector<128x128xbf16>, vector<2x128xf32> -> vector<2x128xf32>
    %31 = vector.shape_cast %27 : vector<32x128xf32> to vector<2x16x128xf32>
    %32 = vector.shape_cast %30 : vector<2x128xf32> to vector<2x1x128xf32>
    %33 = vector.broadcast %32 : vector<2x1x128xf32> to vector<2x16x128xf32>
    %34 = arith.addf %31, %33 : vector<2x16x128xf32>
    %cst_31 = arith.constant 0.000000e+00 : f32
    %35 = vector.broadcast %cst_31 : f32 to vector<2x16x128xf32>
    %36 = arith.maximumf %34, %35 : vector<2x16x128xf32>
    %c0_32 = arith.constant 0 : index
    %c0_33 = arith.constant 0 : index
    %c0_34 = arith.constant 0 : index
    %37 = vector.load %arg9[%c0_32, %c0_33, %c0_34] : memref<2x16x128xf32, #tpu.memory_space<vmem>>, vector<2x16x128xf32>
    tpu.vector_store %arg9[%c0_32, %c0_33, %c0_34], %36 {strides = array<i32>} : memref<2x16x128xf32, #tpu.memory_space<vmem>>, vector<2x16x128xf32>,
    return
  }
}

</mosaic_0001>

<llo_original>
// kernel: tpu_custom_call.1
$region0: #{tpu_custom_call.1}
  #allocation0 [shape = 'u32[]', space=smem, size = 0x4, offset = 0x4, fixed_abs, tag = 'smem constant byte address 0x4 - core index']
  #allocation1 [shape = 'u32[144,128]{1,0:T(1,128)}', space=vmem, size = 0x12000, scoped, tag = 'internal scratch']
  %s0 = inlined_call_operand.hbm [shape: bf16[2,16,64], index: 0, kind: input, shape index: {}]
  %s1 = inlined_call_operand.hbm [shape: bf16[32,576], index: 1, kind: input, shape index: {}]
  %s2 = inlined_call_operand.hbm [shape: bf16[32,576], index: 2, kind: input, shape index: {}]
  %s3 = inlined_call_operand.hbm [shape: bf16[64,256], index: 3, kind: input, shape index: {}]
  %s4 = inlined_call_operand.hbm [shape: bf16[576,128], index: 4, kind: input, shape index: {}]
  %s5 = inlined_call_operand.hbm [shape: bf16[576,128], index: 5, kind: input, shape index: {}]
  %s6 = inlined_call_operand.hbm [shape: bf16[64,128], index: 6, kind: input, shape index: {}]
  %s7 = inlined_call_operand.hbm [shape: bf16[512,128], index: 7, kind: input, shape index: {}]
  %s8 = inlined_call_operand.hbm [shape: bf16[128,128], index: 8, kind: input, shape index: {}]
  %s9 = inlined_call_operand.hbm [shape: f32[2,16,128], index: 9, kind: output, shape index: {}]
  %s10 = sld [smem:[#allocation0]]
  $region82: #{tpu_custom_call.1} parent=0
    _
  %s12 = ssub.s32 1, %s10
  %s13 = scalar_select 0, %s12, %s10
  $region1: #{tpu_custom_call.1} parent=0
    #allocation2 [shape = 'u8[8192]{0}', space=vmem, size = 0x2000, scoped, tag = 'input window, operand 0, single buffered']
    #allocation3 [shape = 's32[1]{0}', space=sflag, size = 0x4, scoped, tag = 'scoped memory for tpu_custom_call.1']
    #allocation4 [shape = 's32[1]{0}', space=sflag, size = 0x4, scoped, tag = 'scoped memory for tpu_custom_call.1']
    #allocation5 [shape = 'u8[40960]{0}', space=vmem, size = 0xa000, scoped, tag = 'input window, operand 1, single buffered']
    #allocation6 [shape = 's32[1]{0}', space=sflag, size = 0x4, scoped, tag = 'scoped memory for tpu_custom_call.1']
    #allocation7 [shape = 'u8[40960]{0}', space=vmem, size = 0xa000, scoped, tag = 'input window, operand 2, single buffered']
    #allocation8 [shape = 'u8[32768]{0}', space=vmem, size = 0x8000, scoped, tag = 'input window, operand 3, single buffered']
    #allocation9 [shape = 's32[1]{0}', space=sflag, size = 0x4, scoped, tag = 'scoped memory for tpu_custom_call.1']
    #allocation10 [shape = 'u8[147456]{0}', space=vmem, size = 0x24000, scoped, tag = 'input window, operand 4, single buffered']
    #allocation11 [shape = 'u8[147456]{0}', space=vmem, size = 0x24000, scoped, tag = 'input window, operand 5, single buffered']
    #allocation12 [shape = 's32[1]{0}', space=sflag, size = 0x4, scoped, tag = 'scoped memory for tpu_custom_call.1']
    #allocation13 [shape = 'u8[16384]{0}', space=vmem, size = 0x4000, scoped, tag = 'input window, operand 6, single buffered']
    #allocation14 [shape = 'u8[131072]{0}', space=vmem, size = 0x20000, scoped, tag = 'input window, operand 7, single buffered']
    #allocation15 [shape = 's32[1]{0}', space=sflag, size = 0x4, scoped, tag = 'scoped memory for tpu_custom_call.1']
    #allocation16 [shape = 'u8[32768]{0}', space=vmem, size = 0x8000, scoped, tag = 'input window, operand 8, single buffered']
    #allocation17 [shape = 'u8[16384]{0}', space=vmem, size = 0x4000, scoped, tag = 'output window, operand 0, single buffered']
    %14 = vsyncpa [#allocation3], 0
    %15 = vsyncpa [#allocation6], 0
    %16 = vsyncpa [#allocation9], 0
    %17 = vsyncpa [#allocation12], 0
    %18 = vsyncpa [#allocation15], 0
    %19 = vsyncpa [#allocation4], 0
    // Predicated region
    $region2: #{tpu_custom_call.1} parent=1 // pred_check
      _
    $region3: #{tpu_custom_call.1} parent=1 // pred_check_branch
      %21 = sbr.rel (0) target = $region5
    $region4: #{tpu_custom_call.1} parent=1 // pred_region
      %s23 = ssub.s32 256, 256
      %24 = vsyncadd [#allocation3], %s23
      %s25 = sshll.u32 [#allocation2], 4
      %s26 = int_to_ptr.vmem [resolvable:$true] %s25
      %31 = dma.hbm_to_vmem [thread:$0]  %s0, 256, %s26, [#allocation3], 64, 64, 4
    $region5: #{tpu_custom_call.1} parent=1 // pred_fallthru
      _
    // Predicated region
    $region6: #{tpu_custom_call.1} parent=1 // pred_check
      _
    $region7: #{tpu_custom_call.1} parent=1 // pred_check_branch
      %33 = sbr.rel (0) target = $region9
    $region8: #{tpu_custom_call.1} parent=1 // pred_region
      %s35 = ssub.s32 1280, 1280
      %36 = vsyncadd [#allocation6], %s35
      %s37 = sshll.u32 [#allocation5], 4
      %s38 = int_to_ptr.vmem [resolvable:$true] %s37
      %43 = dma.hbm_to_vmem [thread:$0]  %s1, 1280, %s38, [#allocation6], 320, 320, 20
    $region9: #{tpu_custom_call.1} parent=1 // pred_fallthru
      _
    // Predicated region
    $region10: #{tpu_custom_call.1} parent=1 // pred_check
      _
    $region11: #{tpu_custom_call.1} parent=1 // pred_check_branch
      %45 = sbr.rel (0) target = $region13
    $region12: #{tpu_custom_call.1} parent=1 // pred_region
      %s47 = ssub.s32 1280, 1280
      %48 = vsyncadd [#allocation6], %s47
      %s49 = sshll.u32 [#allocation7], 4
      %s50 = int_to_ptr.vmem [resolvable:$true] %s49
      %55 = dma.hbm_to_vmem [thread:$0]  %s2, 1280, %s50, [#allocation6], 320, 320, 20
    $region13: #{tpu_custom_call.1} parent=1 // pred_fallthru
      _
    // Predicated region
    $region14: #{tpu_custom_call.1} parent=1 // pred_check
      _
    $region15: #{tpu_custom_call.1} parent=1 // pred_check_branch
      %57 = sbr.rel (0) target = $region17
    $region16: #{tpu_custom_call.1} parent=1 // pred_region
      %s59 = ssub.s32 1024, 1024
      %60 = vsyncadd [#allocation9], %s59
      %s61 = sshll.u32 [#allocation8], 4
      %s62 = int_to_ptr.vmem [resolvable:$true] %s61
      %67 = dma.hbm_to_vmem [thread:$0]  %s3, 1024, %s62, [#allocation9], 128, 128, 8
    $region17: #{tpu_custom_call.1} parent=1 // pred_fallthru
      _
    // Predicated region
    $region18: #{tpu_custom_call.1} parent=1 // pred_check
      _
    $region19: #{tpu_custom_call.1} parent=1 // pred_check_branch
      %69 = sbr.rel (0) target = $region21
    $region20: #{tpu_custom_call.1} parent=1 // pred_region
      %s71 = ssub.s32 4608, 4608
      %72 = vsyncadd [#allocation9], %s71
      %s73 = sshll.u32 [#allocation10], 4
      %s74 = int_to_ptr.vmem [resolvable:$true] %s73
      %79 = dma.hbm_to_vmem [thread:$0]  %s4, 4608, %s74, [#allocation9], 64, 64, 4
    $region21: #{tpu_custom_call.1} parent=1 // pred_fallthru
      _
    // Predicated region
    $region22: #{tpu_custom_call.1} parent=1 // pred_check
      _
    $region23: #{tpu_custom_call.1} parent=1 // pred_check_branch
      %81 = sbr.rel (0) target = $region25
    $region24: #{tpu_custom_call.1} parent=1 // pred_region
      %s83 = ssub.s32 4608, 4608
      %84 = vsyncadd [#allocation12], %s83
      %s85 = sshll.u32 [#allocation11], 4
      %s86 = int_to_ptr.vmem [resolvable:$true] %s85
      %91 = dma.hbm_to_vmem [thread:$0]  %s5, 4608, %s86, [#allocation12], 64, 64, 4
    $region25: #{tpu_custom_call.1} parent=1 // pred_fallthru
      _
    // Predicated region
    $region26: #{tpu_custom_call.1} parent=1 // pred_check
      _
    $region27: #{tpu_custom_call.1} parent=1 // pred_check_branch
      %93 = sbr.rel (0) target = $region29
    $region28: #{tpu_custom_call.1} parent=1 // pred_region
      %s95 = ssub.s32 512, 512
      %96 = vsyncadd [#allocation12], %s95
      %s97 = sshll.u32 [#allocation13], 4
      %s98 = int_to_ptr.vmem [resolvable:$true] %s97
      %103 = dma.hbm_to_vmem [thread:$0]  %s6, 512, %s98, [#allocation12], 64, 64, 4
    $region29: #{tpu_custom_call.1} parent=1 // pred_fallthru
      _
    // Predicated region
    $region30: #{tpu_custom_call.1} parent=1 // pred_check
      _
    $region31: #{tpu_custom_call.1} parent=1 // pred_check_branch
      %105 = sbr.rel (0) target = $region33
    $region32: #{tpu_custom_call.1} parent=1 // pred_region
      %s107 = ssub.s32 4096, 4096
      %108 = vsyncadd [#allocation15], %s107
      %s109 = sshll.u32 [#allocation14], 4
      %s110 = int_to_ptr.vmem [resolvable:$true] %s109
      %115 = dma.hbm_to_vmem [thread:$0]  %s7, 4096, %s110, [#allocation15], 64, 64, 4
    $region33: #{tpu_custom_call.1} parent=1 // pred_fallthru
      _
    // Predicated region
    $region34: #{tpu_custom_call.1} parent=1 // pred_check
      _
    $region35: #{tpu_custom_call.1} parent=1 // pred_check_branch
      %117 = sbr.rel (0) target = $region37
    $region36: #{tpu_custom_call.1} parent=1 // pred_region
      %s119 = ssub.s32 1024, 1024
      %120 = vsyncadd [#allocation15], %s119
      %s121 = sshll.u32 [#allocation16], 4
      %s122 = int_to_ptr.vmem [resolvable:$true] %s121
      %127 = dma.hbm_to_vmem [thread:$0]  %s8, 1024, %s122, [#allocation15], 64, 64, 4
    $region37: #{tpu_custom_call.1} parent=1 // pred_fallthru
      _
    // Predicated region
    $region38: #{tpu_custom_call.1} parent=1 // pred_check
      _
    $region39: #{tpu_custom_call.1} parent=1 // pred_check_branch
      %129 = sbr.rel (0) target = $region41
    $region40: #{tpu_custom_call.1} parent=1 // pred_region
      %130 = dma.done [#allocation3], 256
    $region41: #{tpu_custom_call.1} parent=1 // pred_fallthru
      _
    // Predicated region
    $region42: #{tpu_custom_call.1} parent=1 // pred_check
      _
    $region43: #{tpu_custom_call.1} parent=1 // pred_check_branch
      %132 = sbr.rel (0) target = $region45
    $region44: #{tpu_custom_call.1} parent=1 // pred_region
      %133 = dma.done [#allocation6], 1280
    $region45: #{tpu_custom_call.1} parent=1 // pred_fallthru
      _
    // Predicated region
    $region46: #{tpu_custom_call.1} parent=1 // pred_check
      _
    $region47: #{tpu_custom_call.1} parent=1 // pred_check_branch
      %135 = sbr.rel (0) target = $region49
    $region48: #{tpu_custom_call.1} parent=1 // pred_region
      %136 = dma.done [#allocation6], 1280
    $region49: #{tpu_custom_call.1} parent=1 // pred_fallthru
      _
    // Predicated region
    $region50: #{tpu_custom_call.1} parent=1 // pred_check
      _
    $region51: #{tpu_custom_call.1} parent=1 // pred_check_branch
      %138 = sbr.rel (0) target = $region53
    $region52: #{tpu_custom_call.1} parent=1 // pred_region
      %139 = dma.done [#allocation9], 1024
    $region53: #{tpu_custom_call.1} parent=1 // pred_fallthru
      _
    // Predicated region
    $region54: #{tpu_custom_call.1} parent=1 // pred_check
      _
    $region55: #{tpu_custom_call.1} parent=1 // pred_check_branch
      %141 = sbr.rel (0) target = $region57
    $region56: #{tpu_custom_call.1} parent=1 // pred_region
      %142 = dma.done [#allocation9], 4608
    $region57: #{tpu_custom_call.1} parent=1 // pred_fallthru
      _
    // Predicated region
    $region58: #{tpu_custom_call.1} parent=1 // pred_check
      _
    $region59: #{tpu_custom_call.1} parent=1 // pred_check_branch
      %144 = sbr.rel (0) target = $region61
    $region60: #{tpu_custom_call.1} parent=1 // pred_region
      %145 = dma.done [#allocation12], 4608
    $region61: #{tpu_custom_call.1} parent=1 // pred_fallthru
      _
    // Predicated region
    $region62: #{tpu_custom_call.1} parent=1 // pred_check
      _
    $region63: #{tpu_custom_call.1} parent=1 // pred_check_branch
      %147 = sbr.rel (0) target = $region65
    $region64: #{tpu_custom_call.1} parent=1 // pred_region
      %148 = dma.done [#allocation12], 512
    $region65: #{tpu_custom_call.1} parent=1 // pred_fallthru
      _
    // Predicated region
    $region66: #{tpu_custom_call.1} parent=1 // pred_check
      _
    $region67: #{tpu_custom_call.1} parent=1 // pred_check_branch
      %150 = sbr.rel (0) target = $region69
    $region68: #{tpu_custom_call.1} parent=1 // pred_region
      %151 = dma.done [#allocation15], 4096
    $region69: #{tpu_custom_call.1} parent=1 // pred_fallthru
      _
    // Predicated region
    $region70: #{tpu_custom_call.1} parent=1 // pred_check
      _
    $region71: #{tpu_custom_call.1} parent=1 // pred_check_branch
      %153 = sbr.rel (0) target = $region73
    $region72: #{tpu_custom_call.1} parent=1 // pred_region
      %154 = dma.done [#allocation15], 1024
    $region73: #{tpu_custom_call.1} parent=1 // pred_fallthru
      _
    %v156 = vld [vmem:[#allocation2] sm:$0xf]
    %v157 = vld [vmem:[#allocation2 + $0x4] sm:$0xf]
    %v158 = vld [vmem:[#allocation2 + $0x8] sm:$0xf]
    %v159 = vld [vmem:[#allocation2 + $0xc] sm:$0xf]
    %v160 = vld [vmem:[#allocation8] sm:$0xff]
    %v161 = vld [vmem:[#allocation8 + $0x8] sm:$0xff]
    %v162 = vld [vmem:[#allocation8 + $0x10] sm:$0xff]
    %v163 = vld [vmem:[#allocation8 + $0x18] sm:$0xff]
    %v164 = vld [vmem:[#allocation8 + $0x20] sm:$0xff]
    %v165 = vld [vmem:[#allocation8 + $0x28] sm:$0xff]
    %v166 = vld [vmem:[#allocation8 + $0x30] sm:$0xff]
    %v167 = vld [vmem:[#allocation8 + $0x38] sm:$0xff]
    %v172 = vunpack.c.l.b16 %v156
    %v173 = vunpack.c.l.b16 %v157
    %v174 = vunpack.c.l.b16 %v158
    %v175 = vunpack.c.l.b16 %v159
    %v176 = vpack.c.b16 %v173, %v172
    %v177 = vpack.c.b16 %v175, %v174
    %v186 = vunpack.c.l.b16 %v160
    %v187 = vunpack.c.h.b16 %v160
    %v188 = vunpack.c.l.b16 %v161
    %v189 = vunpack.c.h.b16 %v161
    %v190 = vunpack.c.l.b16 %v162
    %v191 = vunpack.c.h.b16 %v162
    %v192 = vunpack.c.l.b16 %v163
    %v193 = vunpack.c.h.b16 %v163
    %v194 = vunpack.c.l.b16 %v164
    %v195 = vunpack.c.h.b16 %v164
    %v196 = vunpack.c.l.b16 %v165
    %v197 = vunpack.c.h.b16 %v165
    %v198 = vunpack.c.l.b16 %v166
    %v199 = vunpack.c.h.b16 %v166
    %v200 = vunpack.c.l.b16 %v167
    %v201 = vunpack.c.h.b16 %v167
    %v202 = vpack.c.b16 %v188, %v186
    %v203 = vpack.c.b16 %v189, %v187
    %v204 = vpack.c.b16 %v192, %v190
    %v205 = vpack.c.b16 %v193, %v191
    %v206 = vpack.c.b16 %v196, %v194
    %v207 = vpack.c.b16 %v197, %v195
    %v208 = vpack.c.b16 %v200, %v198
    %v209 = vpack.c.b16 %v201, %v199
    %vm218 = vcmask 523264
    %v220 = vsel %vm218, %v176, 0
    %v223 = vsel %vm218, %v177, 0
    %225 = vmatprep.subr.bf16.mxu0 0
    %226 = vmatpush1.bf16.msra.mxu0 0
    %227 = vmatprep.subr.bf16.mxu0 0
    %228 = vmatpush1.bf16.msra.mxu0 0
    %229 = vmatprep.subr.bf16.mxu0 0
    %230 = vmatpush1.bf16.msra.mxu0 0
    %231 = vmatprep.subr.bf16.mxu0 0
    %232 = vmatpush1.bf16.msra.mxu0 0
    %233 = vmatprep.subr.bf16.mxu0 %v209
    %234 = vmatpush1.bf16.msra.mxu0 %v208
    %235 = vmatprep.subr.bf16.mxu0 %v207
    %236 = vmatpush1.bf16.msra.mxu0 %v206
    %237 = vmatprep.subr.bf16.mxu0 %v205
    %238 = vmatpush1.bf16.msra.mxu0 %v204
    %239 = vmatprep.subr.bf16.mxu0 %v203
    %240 = vmatpush1.bf16.msra.mxu0 %v202
    %241 = vmatprep.subr.bf16.mxu0 0
    %242 = vmatpush2.bf16.msra.mxu0 0
    %243 = vmatprep.subr.bf16.mxu0 0
    %244 = vmatpush2.bf16.msra.mxu0 0
    %245 = vmatprep.subr.bf16.mxu0 0
    %246 = vmatpush2.bf16.msra.mxu0 0
    %247 = vmatprep.subr.bf16.mxu0 0
    %248 = vmatpush2.bf16.msra.mxu0 0
    %249 = vmatprep.subr.bf16.mxu0 0
    %250 = vmatpush2.bf16.msra.mxu0 0
    %251 = vmatprep.subr.bf16.mxu0 0
    %252 = vmatpush2.bf16.msra.mxu0 0
    %253 = vmatprep.subr.bf16.mxu0 0
    %254 = vmatpush2.bf16.msra.mxu0 0
    %255 = vmatprep.subr.bf16.mxu0 0
    %256 = vmatpush2.bf16.msra.mxu0 0
    %257 = vmatprep.mubr.bf16.mxu0 0
    %258 = vmatmul.mubr.bf16.gmra.mxu0 %v220
    %v259 = vpop.f32.mrf.mxu0
    %v260 = vadd.f32 0.0, %v259
    %v261 = vpop.f32.mrf.mxu0
    %v262 = vadd.f32 0.0, %v261
    %v263 = vpop.f32.mrf.mxu0
    %v264 = vadd.f32 0.0, %v263
    %v265 = vpop.f32.mrf.mxu0
    %v266 = vadd.f32 0.0, %v265
    %267 = vmatprep.mubr.bf16.mxu0 0
    %268 = vmatmul.mubr.bf16.gmra.mxu0 %v223
    %v269 = vpop.f32.mrf.mxu0
    %v270 = vadd.f32 0.0, %v269
    %v271 = vpop.f32.mrf.mxu0
    %v272 = vadd.f32 0.0, %v271
    %v273 = vpop.f32.mrf.mxu0
    %v274 = vadd.f32 0.0, %v273
    %v275 = vpop.f32.mrf.mxu0
    %v276 = vadd.f32 0.0, %v275
    %277 = vdwg.mxu0
    %v278 = vmax.f32 %v260, 0.0
    %v279 = vmax.f32 %v262, 0.0
    %v280 = vmax.f32 %v264, 0.0
    %v281 = vmax.f32 %v266, 0.0
    %v282 = vmax.f32 %v270, 0.0
    %v283 = vmax.f32 %v272, 0.0
    %v284 = vmax.f32 %v274, 0.0
    %v285 = vmax.f32 %v276, 0.0
    %v286 = vld [vmem:[#allocation5] sm:$0xff]
    %v287 = vld [vmem:[#allocation5 + $0x8] sm:$0xff]
    %v288 = vld [vmem:[#allocation5 + $0x10] sm:$0xf]
    %v289 = vld [vmem:[#allocation5 + $0x14] sm:$0xff]
    %v290 = vld [vmem:[#allocation5 + $0x1c] sm:$0xff]
    %v291 = vld [vmem:[#allocation5 + $0x24] sm:$0xf]
    %v292 = vld [vmem:[#allocation5 + $0x28] sm:$0xff]
    %v293 = vld [vmem:[#allocation5 + $0x30] sm:$0xff]
    %v294 = vld [vmem:[#allocation5 + $0x38] sm:$0xf]
    %v295 = vld [vmem:[#allocation5 + $0x3c] sm:$0xff]
    %v296 = vld [vmem:[#allocation5 + $0x44] sm:$0xff]
    %v297 = vld [vmem:[#allocation5 + $0x4c] sm:$0xf]
    %v298 = vld [vmem:[#allocation10] sm:$0xf]
    %v299 = vld [vmem:[#allocation10 + $0x4] sm:$0xf]
    %v300 = vld [vmem:[#allocation10 + $0x8] sm:$0xf]
    %v301 = vld [vmem:[#allocation10 + $0xc] sm:$0xf]
    %v302 = vld [vmem:[#allocation10 + $0x10] sm:$0xf]
    %v303 = vld [vmem:[#allocation10 + $0x14] sm:$0xf]
    %v304 = vld [vmem:[#allocation10 + $0x18] sm:$0xf]
    %v305 = vld [vmem:[#allocation10 + $0x1c] sm:$0xf]
    %v306 = vld [vmem:[#allocation10 + $0x20] sm:$0xf]
    %v307 = vld [vmem:[#allocation10 + $0x24] sm:$0xf]
    %v308 = vld [vmem:[#allocation10 + $0x28] sm:$0xf]
    %v309 = vld [vmem:[#allocation10 + $0x2c] sm:$0xf]
    %v310 = vld [vmem:[#allocation10 + $0x30] sm:$0xf]
    %v311 = vld [vmem:[#allocation10 + $0x34] sm:$0xf]
    %v312 = vld [vmem:[#allocation10 + $0x38] sm:$0xf]
    %v313 = vld [vmem:[#allocation10 + $0x3c] sm:$0xf]
    %v314 = vld [vmem:[#allocation10 + $0x40] sm:$0xf]
    %v315 = vld [vmem:[#allocation10 + $0x44] sm:$0xf]
    %v316 = vld [vmem:[#allocation10 + $0x48] sm:$0xf]
    %v317 = vld [vmem:[#allocation10 + $0x4c] sm:$0xf]
    %v318 = vld [vmem:[#allocation10 + $0x50] sm:$0xf]
    %v319 = vld [vmem:[#allocation10 + $0x54] sm:$0xf]
    %v320 = vld [vmem:[#allocation10 + $0x58] sm:$0xf]
    %v321 = vld [vmem:[#allocation10 + $0x5c] sm:$0xf]
    %v322 = vld [vmem:[#allocation10 + $0x60] sm:$0xf]
    %v323 = vld [vmem:[#allocation10 + $0x64] sm:$0xf]
    %v324 = vld [vmem:[#allocation10 + $0x68] sm:$0xf]
    %v325 = vld [vmem:[#allocation10 + $0x6c] sm:$0xf]
    %v326 = vld [vmem:[#allocation10 + $0x70] sm:$0xf]
    %v327 = vld [vmem:[#allocation10 + $0x74] sm:$0xf]
    %v328 = vld [vmem:[#allocation10 + $0x78] sm:$0xf]
    %v329 = vld [vmem:[#allocation10 + $0x7c] sm:$0xf]
    %v330 = vld [vmem:[#allocation10 + $0x80] sm:$0xf]
    %v331 = vld [vmem:[#allocation10 + $0x84] sm:$0xf]
    %v332 = vld [vmem:[#allocation10 + $0x88] sm:$0xf]
    %v333 = vld [vmem:[#allocation10 + $0x8c] sm:$0xf]
    %v334 = vld [vmem:[#allocation10 + $0x90] sm:$0xf]
    %v335 = vld [vmem:[#allocation10 + $0x94] sm:$0xf]
    %v336 = vld [vmem:[#allocation10 + $0x98] sm:$0xf]
    %v337 = vld [vmem:[#allocation10 + $0x9c] sm:$0xf]
    %v338 = vld [vmem:[#allocation10 + $0xa0] sm:$0xf]
    %v339 = vld [vmem:[#allocation10 + $0xa4] sm:$0xf]
    %v340 = vld [vmem:[#allocation10 + $0xa8] sm:$0xf]
    %v341 = vld [vmem:[#allocation10 + $0xac] sm:$0xf]
    %v342 = vld [vmem:[#allocation10 + $0xb0] sm:$0xf]
    %v343 = vld [vmem:[#allocation10 + $0xb4] sm:$0xf]
    %v344 = vld [vmem:[#allocation10 + $0xb8] sm:$0xf]
    %v345 = vld [vmem:[#allocation10 + $0xbc] sm:$0xf]
    %v346 = vld [vmem:[#allocation10 + $0xc0] sm:$0xf]
    %v347 = vld [vmem:[#allocation10 + $0xc4] sm:$0xf]
    %v348 = vld [vmem:[#allocation10 + $0xc8] sm:$0xf]
    %v349 = vld [vmem:[#allocation10 + $0xcc] sm:$0xf]
    %v350 = vld [vmem:[#allocation10 + $0xd0] sm:$0xf]
    %v351 = vld [vmem:[#allocation10 + $0xd4] sm:$0xf]
    %v352 = vld [vmem:[#allocation10 + $0xd8] sm:$0xf]
    %v353 = vld [vmem:[#allocation10 + $0xdc] sm:$0xf]
    %v354 = vld [vmem:[#allocation10 + $0xe0] sm:$0xf]
    %v355 = vld [vmem:[#allocation10 + $0xe4] sm:$0xf]
    %v356 = vld [vmem:[#allocation10 + $0xe8] sm:$0xf]
    %v357 = vld [vmem:[#allocation10 + $0xec] sm:$0xf]
    %v358 = vld [vmem:[#allocation10 + $0xf0] sm:$0xf]
    %v359 = vld [vmem:[#allocation10 + $0xf4] sm:$0xf]
    %v360 = vld [vmem:[#allocation10 + $0xf8] sm:$0xf]
    %v361 = vld [vmem:[#allocation10 + $0xfc] sm:$0xf]
    %v362 = vld [vmem:[#allocation10 + $0x100] sm:$0xf]
    %v363 = vld [vmem:[#allocation10 + $0x104] sm:$0xf]
    %v364 = vld [vmem:[#allocation10 + $0x108] sm:$0xf]
    %v365 = vld [vmem:[#allocation10 + $0x10c] sm:$0xf]
    %v366 = vld [vmem:[#allocation10 + $0x110] sm:$0xf]
    %v367 = vld [vmem:[#allocation10 + $0x114] sm:$0xf]
    %v368 = vld [vmem:[#allocation10 + $0x118] sm:$0xf]
    %v369 = vld [vmem:[#allocation10 + $0x11c] sm:$0xf]
    %v382 = vunpack.c.l.b16 %v286
    %v383 = vunpack.c.h.b16 %v286
    %v384 = vunpack.c.l.b16 %v287
    %v385 = vunpack.c.h.b16 %v287
    %v386 = vunpack.c.l.b16 %v288
    %v387 = vunpack.c.l.b16 %v289
    %v388 = vunpack.c.h.b16 %v289
    %v389 = vunpack.c.l.b16 %v290
    %v390 = vunpack.c.h.b16 %v290
    %v391 = vunpack.c.l.b16 %v291
    %v392 = vunpack.c.l.b16 %v292
    %v393 = vunpack.c.h.b16 %v292
    %v394 = vunpack.c.l.b16 %v293
    %v395 = vunpack.c.h.b16 %v293
    %v396 = vunpack.c.l.b16 %v294
    %v397 = vunpack.c.l.b16 %v295
    %v398 = vunpack.c.h.b16 %v295
    %v399 = vunpack.c.l.b16 %v296
    %v400 = vunpack.c.h.b16 %v296
    %v401 = vunpack.c.l.b16 %v297
    %v402 = vpack.c.b16 %v387, %v382
    %v403 = vpack.c.b16 %v388, %v383
    %v404 = vpack.c.b16 %v389, %v384
    %v405 = vpack.c.b16 %v390, %v385
    %v406 = vpack.c.b16 %v391, %v386
    %v407 = vpack.c.b16 %v397, %v392
    %v408 = vpack.c.b16 %v398, %v393
    %v409 = vpack.c.b16 %v399, %v394
    %v410 = vpack.c.b16 %v400, %v395
    %v411 = vpack.c.b16 %v401, %v396
    %v492 = vunpack.c.l.b16 %v298
    %v493 = vunpack.c.l.b16 %v299
    %v494 = vunpack.c.l.b16 %v300
    %v495 = vunpack.c.l.b16 %v301
    %v496 = vunpack.c.l.b16 %v302
    %v497 = vunpack.c.l.b16 %v303
    %v498 = vunpack.c.l.b16 %v304
    %v499 = vunpack.c.l.b16 %v305
    %v500 = vunpack.c.l.b16 %v306
    %v501 = vunpack.c.l.b16 %v307
    %v502 = vunpack.c.l.b16 %v308
    %v503 = vunpack.c.l.b16 %v309
    %v504 = vunpack.c.l.b16 %v310
    %v505 = vunpack.c.l.b16 %v311
    %v506 = vunpack.c.l.b16 %v312
    %v507 = vunpack.c.l.b16 %v313
    %v508 = vunpack.c.l.b16 %v314
    %v509 = vunpack.c.l.b16 %v315
    %v510 = vunpack.c.l.b16 %v316
    %v511 = vunpack.c.l.b16 %v317
    %v512 = vunpack.c.l.b16 %v318
    %v513 = vunpack.c.l.b16 %v319
    %v514 = vunpack.c.l.b16 %v320
    %v515 = vunpack.c.l.b16 %v321
    %v516 = vunpack.c.l.b16 %v322
    %v517 = vunpack.c.l.b16 %v323
    %v518 = vunpack.c.l.b16 %v324
    %v519 = vunpack.c.l.b16 %v325
    %v520 = vunpack.c.l.b16 %v326
    %v521 = vunpack.c.l.b16 %v327
    %v522 = vunpack.c.l.b16 %v328
    %v523 = vunpack.c.l.b16 %v329
    %v524 = vunpack.c.l.b16 %v330
    %v525 = vunpack.c.l.b16 %v331
    %v526 = vunpack.c.l.b16 %v332
    %v527 = vunpack.c.l.b16 %v333
    %v528 = vunpack.c.l.b16 %v334
    %v529 = vunpack.c.l.b16 %v335
    %v530 = vunpack.c.l.b16 %v336
    %v531 = vunpack.c.l.b16 %v337
    %v532 = vunpack.c.l.b16 %v338
    %v533 = vunpack.c.l.b16 %v339
    %v534 = vunpack.c.l.b16 %v340
    %v535 = vunpack.c.l.b16 %v341
    %v536 = vunpack.c.l.b16 %v342
    %v537 = vunpack.c.l.b16 %v343
    %v538 = vunpack.c.l.b16 %v344
    %v539 = vunpack.c.l.b16 %v345
    %v540 = vunpack.c.l.b16 %v346
    %v541 = vunpack.c.l.b16 %v347
    %v542 = vunpack.c.l.b16 %v348
    %v543 = vunpack.c.l.b16 %v349
    %v544 = vunpack.c.l.b16 %v350
    %v545 = vunpack.c.l.b16 %v351
    %v546 = vunpack.c.l.b16 %v352
    %v547 = vunpack.c.l.b16 %v353
    %v548 = vunpack.c.l.b16 %v354
    %v549 = vunpack.c.l.b16 %v355
    %v550 = vunpack.c.l.b16 %v356
    %v551 = vunpack.c.l.b16 %v357
    %v552 = vunpack.c.l.b16 %v358
    %v553 = vunpack.c.l.b16 %v359
    %v554 = vunpack.c.l.b16 %v360
    %v555 = vunpack.c.l.b16 %v361
    %v556 = vunpack.c.l.b16 %v362
    %v557 = vunpack.c.l.b16 %v363
    %v558 = vunpack.c.l.b16 %v364
    %v559 = vunpack.c.l.b16 %v365
    %v560 = vunpack.c.l.b16 %v366
    %v561 = vunpack.c.l.b16 %v367
    %v562 = vunpack.c.l.b16 %v368
    %v563 = vunpack.c.l.b16 %v369
    %v564 = vpack.c.b16 %v493, %v492
    %v565 = vpack.c.b16 %v495, %v494
    %v566 = vpack.c.b16 %v497, %v496
    %v567 = vpack.c.b16 %v499, %v498
    %v568 = vpack.c.b16 %v501, %v500
    %v569 = vpack.c.b16 %v503, %v502
    %v570 = vpack.c.b16 %v505, %v504
    %v571 = vpack.c.b16 %v507, %v506
    %v572 = vpack.c.b16 %v509, %v508
    %v573 = vpack.c.b16 %v511, %v510
    %v574 = vpack.c.b16 %v513, %v512
    %v575 = vpack.c.b16 %v515, %v514
    %v576 = vpack.c.b16 %v517, %v516
    %v577 = vpack.c.b16 %v519, %v518
    %v578 = vpack.c.b16 %v521, %v520
    %v579 = vpack.c.b16 %v523, %v522
    %v580 = vpack.c.b16 %v525, %v524
    %v581 = vpack.c.b16 %v527, %v526
    %v582 = vpack.c.b16 %v529, %v528
    %v583 = vpack.c.b16 %v531, %v530
    %v584 = vpack.c.b16 %v533, %v532
    %v585 = vpack.c.b16 %v535, %v534
    %v586 = vpack.c.b16 %v537, %v536
    %v587 = vpack.c.b16 %v539, %v538
    %v588 = vpack.c.b16 %v541, %v540
    %v589 = vpack.c.b16 %v543, %v542
    %v590 = vpack.c.b16 %v545, %v544
    %v591 = vpack.c.b16 %v547, %v546
    %v592 = vpack.c.b16 %v549, %v548
    %v593 = vpack.c.b16 %v551, %v550
    %v594 = vpack.c.b16 %v553, %v552
    %v595 = vpack.c.b16 %v555, %v554
    %v596 = vpack.c.b16 %v557, %v556
    %v597 = vpack.c.b16 %v559, %v558
    %v598 = vpack.c.b16 %v561, %v560
    %v599 = vpack.c.b16 %v563, %v562
    %v637 = vsel %vm218, %v406, 0
    %v640 = vsel %vm218, %v411, 0
    %642 = vmatprep.subr.bf16.mxu0 0
    %643 = vmatpush1.bf16.msra.mxu0 %v571
    %644 = vmatprep.subr.bf16.mxu0 0
    %645 = vmatpush1.bf16.msra.mxu0 %v570
    %646 = vmatprep.subr.bf16.mxu0 0
    %647 = vmatpush1.bf16.msra.mxu0 %v569
    %648 = vmatprep.subr.bf16.mxu0 0
    %649 = vmatpush1.bf16.msra.mxu0 %v568
    %650 = vmatprep.subr.bf16.mxu0 0
    %651 = vmatpush1.bf16.msra.mxu0 %v567
    %652 = vmatprep.subr.bf16.mxu0 0
    %653 = vmatpush1.bf16.msra.mxu0 %v566
    %654 = vmatprep.subr.bf16.mxu0 0
    %655 = vmatpush1.bf16.msra.mxu0 %v565
    %656 = vmatprep.subr.bf16.mxu0 0
    %657 = vmatpush1.bf16.msra.mxu0 %v564
    %658 = vmatprep.subr.bf16.mxu0 0
    %659 = vmatpush2.bf16.msra.mxu0 %v579
    %660 = vmatprep.subr.bf16.mxu0 0
    %661 = vmatpush2.bf16.msra.mxu0 %v578
    %662 = vmatprep.subr.bf16.mxu0 0
    %663 = vmatpush2.bf16.msra.mxu0 %v577
    %664 = vmatprep.subr.bf16.mxu0 0
    %665 = vmatpush2.bf16.msra.mxu0 %v576
    %666 = vmatprep.subr.bf16.mxu0 0
    %667 = vmatpush2.bf16.msra.mxu0 %v575
    %668 = vmatprep.subr.bf16.mxu0 0
    %669 = vmatpush2.bf16.msra.mxu0 %v574
    %670 = vmatprep.subr.bf16.mxu0 0
    %671 = vmatpush2.bf16.msra.mxu0 %v573
    %672 = vmatprep.subr.bf16.mxu0 0
    %673 = vmatpush2.bf16.msra.mxu0 %v572
    %674 = vmatprep.mubr.bf16.mxu0 %v403
    %675 = vmatmul.mubr.bf16.gmra.mxu0 %v402
    %v676 = vpop.f32.mrf.mxu0
    %v677 = vadd.f32 0.0, %v676
    %v678 = vpop.f32.mrf.mxu0
    %v679 = vpop.f32.mrf.mxu0
    %v680 = vadd.f32 0.0, %v679
    %v681 = vpop.f32.mrf.mxu0
    %682 = vmatprep.mubr.bf16.mxu0 %v408
    %683 = vmatmul.mubr.bf16.gmra.mxu0 %v407
    %v684 = vpop.f32.mrf.mxu0
    %v685 = vadd.f32 0.0, %v684
    %v686 = vpop.f32.mrf.mxu0
    %v687 = vpop.f32.mrf.mxu0
    %v688 = vadd.f32 0.0, %v687
    %v689 = vpop.f32.mrf.mxu0
    %690 = vdwg.mxu0
    %691 = vmatprep.subr.bf16.mxu0 0
    %692 = vmatpush1.bf16.msra.mxu0 %v587
    %693 = vmatprep.subr.bf16.mxu0 0
    %694 = vmatpush1.bf16.msra.mxu0 %v586
    %695 = vmatprep.subr.bf16.mxu0 0
    %696 = vmatpush1.bf16.msra.mxu0 %v585
    %697 = vmatprep.subr.bf16.mxu0 0
    %698 = vmatpush1.bf16.msra.mxu0 %v584
    %699 = vmatprep.subr.bf16.mxu0 0
    %700 = vmatpush1.bf16.msra.mxu0 %v583
    %701 = vmatprep.subr.bf16.mxu0 0
    %702 = vmatpush1.bf16.msra.mxu0 %v582
    %703 = vmatprep.subr.bf16.mxu0 0
    %704 = vmatpush1.bf16.msra.mxu0 %v581
    %705 = vmatprep.subr.bf16.mxu0 0
    %706 = vmatpush1.bf16.msra.mxu0 %v580
    %707 = vmatprep.subr.bf16.mxu0 0
    %708 = vmatpush2.bf16.msra.mxu0 %v595
    %709 = vmatprep.subr.bf16.mxu0 0
    %710 = vmatpush2.bf16.msra.mxu0 %v594
    %711 = vmatprep.subr.bf16.mxu0 0
    %712 = vmatpush2.bf16.msra.mxu0 %v593
    %713 = vmatprep.subr.bf16.mxu0 0
    %714 = vmatpush2.bf16.msra.mxu0 %v592
    %715 = vmatprep.subr.bf16.mxu0 0
    %716 = vmatpush2.bf16.msra.mxu0 %v591
    %717 = vmatprep.subr.bf16.mxu0 0
    %718 = vmatpush2.bf16.msra.mxu0 %v590
    %719 = vmatprep.subr.bf16.mxu0 0
    %720 = vmatpush2.bf16.msra.mxu0 %v589
    %721 = vmatprep.subr.bf16.mxu0 0
    %722 = vmatpush2.bf16.msra.mxu0 %v588
    %723 = vmatprep.mubr.bf16.mxu0 %v405
    %724 = vmatmul.mubr.bf16.gmra.mxu0 %v404
    %v725 = vpop.f32.mrf.mxu0
    %v726 = vadd.f32 %v677, %v725
    %v727 = vpop.f32.mrf.mxu0
    %v728 = vpop.f32.mrf.mxu0
    %v729 = vadd.f32 %v680, %v728
    %v730 = vpop.f32.mrf.mxu0
    %731 = vmatprep.mubr.bf16.mxu0 %v410
    %732 = vmatmul.mubr.bf16.gmra.mxu0 %v409
    %v733 = vpop.f32.mrf.mxu0
    %v734 = vadd.f32 %v685, %v733
    %v735 = vpop.f32.mrf.mxu0
    %v736 = vpop.f32.mrf.mxu0
    %v737 = vadd.f32 %v688, %v736
    %v738 = vpop.f32.mrf.mxu0
    %739 = vdwg.mxu0
    %740 = vmatprep.subr.bf16.mxu0 0
    %741 = vmatpush1.bf16.msra.mxu0 0
    %742 = vmatprep.subr.bf16.mxu0 0
    %743 = vmatpush1.bf16.msra.mxu0 0
    %744 = vmatprep.subr.bf16.mxu0 0
    %745 = vmatpush1.bf16.msra.mxu0 0
    %746 = vmatprep.subr.bf16.mxu0 0
    %747 = vmatpush1.bf16.msra.mxu0 0
    %748 = vmatprep.subr.bf16.mxu0 0
    %749 = vmatpush1.bf16.msra.mxu0 %v599
    %750 = vmatprep.subr.bf16.mxu0 0
    %751 = vmatpush1.bf16.msra.mxu0 %v598
    %752 = vmatprep.subr.bf16.mxu0 0
    %753 = vmatpush1.bf16.msra.mxu0 %v597
    %754 = vmatprep.subr.bf16.mxu0 0
    %755 = vmatpush1.bf16.msra.mxu0 %v596
    %756 = vmatprep.subr.bf16.mxu0 0
    %757 = vmatpush2.bf16.msra.mxu0 0
    %758 = vmatprep.subr.bf16.mxu0 0
    %759 = vmatpush2.bf16.msra.mxu0 0
    %760 = vmatprep.subr.bf16.mxu0 0
    %761 = vmatpush2.bf16.msra.mxu0 0
    %762 = vmatprep.subr.bf16.mxu0 0
    %763 = vmatpush2.bf16.msra.mxu0 0
    %764 = vmatprep.subr.bf16.mxu0 0
    %765 = vmatpush2.bf16.msra.mxu0 0
    %766 = vmatprep.subr.bf16.mxu0 0
    %767 = vmatpush2.bf16.msra.mxu0 0
    %768 = vmatprep.subr.bf16.mxu0 0
    %769 = vmatpush2.bf16.msra.mxu0 0
    %770 = vmatprep.subr.bf16.mxu0 0
    %771 = vmatpush2.bf16.msra.mxu0 0
    %772 = vmatprep.mubr.bf16.mxu0 0
    %773 = vmatmul.mubr.bf16.gmra.mxu0 %v637
    %v774 = vpop.f32.mrf.mxu0
    %v775 = vadd.f32 %v726, %v774
    %v776 = vpop.f32.mrf.mxu0
    %v777 = vpop.f32.mrf.mxu0
    %v778 = vadd.f32 %v729, %v777
    %v779 = vpop.f32.mrf.mxu0
    %780 = vmatprep.mubr.bf16.mxu0 0
    %781 = vmatmul.mubr.bf16.gmra.mxu0 %v640
    %v782 = vpop.f32.mrf.mxu0
    %v783 = vadd.f32 %v734, %v782
    %v784 = vpop.f32.mrf.mxu0
    %v785 = vpop.f32.mrf.mxu0
    %v786 = vadd.f32 %v737, %v785
    %v787 = vpop.f32.mrf.mxu0
    %788 = vdwg.mxu0
    %v789 = vmax.f32 %v775, 0.0
    %v790 = vmax.f32 %v778, 0.0
    %v791 = vmax.f32 %v783, 0.0
    %v792 = vmax.f32 %v786, 0.0
    %v793 = vld [vmem:[#allocation7] sm:$0xff]
    %v794 = vld [vmem:[#allocation7 + $0x8] sm:$0xff]
    %v795 = vld [vmem:[#allocation7 + $0x10] sm:$0xf]
    %v796 = vld [vmem:[#allocation7 + $0x14] sm:$0xff]
    %v797 = vld [vmem:[#allocation7 + $0x1c] sm:$0xff]
    %v798 = vld [vmem:[#allocation7 + $0x24] sm:$0xf]
    %v799 = vld [vmem:[#allocation7 + $0x28] sm:$0xff]
    %v800 = vld [vmem:[#allocation7 + $0x30] sm:$0xff]
    %v801 = vld [vmem:[#allocation7 + $0x38] sm:$0xf]
    %v802 = vld [vmem:[#allocation7 + $0x3c] sm:$0xff]
    %v803 = vld [vmem:[#allocation7 + $0x44] sm:$0xff]
    %v804 = vld [vmem:[#allocation7 + $0x4c] sm:$0xf]
    %v805 = vld [vmem:[#allocation11] sm:$0xf]
    %v806 = vld [vmem:[#allocation11 + $0x4] sm:$0xf]
    %v807 = vld [vmem:[#allocation11 + $0x8] sm:$0xf]
    %v808 = vld [vmem:[#allocation11 + $0xc] sm:$0xf]
    %v809 = vld [vmem:[#allocation11 + $0x10] sm:$0xf]
    %v810 = vld [vmem:[#allocation11 + $0x14] sm:$0xf]
    %v811 = vld [vmem:[#allocation11 + $0x18] sm:$0xf]
    %v812 = vld [vmem:[#allocation11 + $0x1c] sm:$0xf]
    %v813 = vld [vmem:[#allocation11 + $0x20] sm:$0xf]
    %v814 = vld [vmem:[#allocation11 + $0x24] sm:$0xf]
    %v815 = vld [vmem:[#allocation11 + $0x28] sm:$0xf]
    %v816 = vld [vmem:[#allocation11 + $0x2c] sm:$0xf]
    %v817 = vld [vmem:[#allocation11 + $0x30] sm:$0xf]
    %v818 = vld [vmem:[#allocation11 + $0x34] sm:$0xf]
    %v819 = vld [vmem:[#allocation11 + $0x38] sm:$0xf]
    %v820 = vld [vmem:[#allocation11 + $0x3c] sm:$0xf]
    %v821 = vld [vmem:[#allocation11 + $0x40] sm:$0xf]
    %v822 = vld [vmem:[#allocation11 + $0x44] sm:$0xf]
    %v823 = vld [vmem:[#allocation11 + $0x48] sm:$0xf]
    %v824 = vld [vmem:[#allocation11 + $0x4c] sm:$0xf]
    %v825 = vld [vmem:[#allocation11 + $0x50] sm:$0xf]
    %v826 = vld [vmem:[#allocation11 + $0x54] sm:$0xf]
    %v827 = vld [vmem:[#allocation11 + $0x58] sm:$0xf]
    %v828 = vld [vmem:[#allocation11 + $0x5c] sm:$0xf]
    %v829 = vld [vmem:[#allocation11 + $0x60] sm:$0xf]
    %v830 = vld [vmem:[#allocation11 + $0x64] sm:$0xf]
    %v831 = vld [vmem:[#allocation11 + $0x68] sm:$0xf]
    %v832 = vld [vmem:[#allocation11 + $0x6c] sm:$0xf]
    %v833 = vld [vmem:[#allocation11 + $0x70] sm:$0xf]
    %v834 = vld [vmem:[#allocation11 + $0x74] sm:$0xf]
    %v835 = vld [vmem:[#allocation11 + $0x78] sm:$0xf]
    %v836 = vld [vmem:[#allocation11 + $0x7c] sm:$0xf]
    %v837 = vld [vmem:[#allocation11 + $0x80] sm:$0xf]
    %v838 = vld [vmem:[#allocation11 + $0x84] sm:$0xf]
    %v839 = vld [vmem:[#allocation11 + $0x88] sm:$0xf]
    %v840 = vld [vmem:[#allocation11 + $0x8c] sm:$0xf]
    %v841 = vld [vmem:[#allocation11 + $0x90] sm:$0xf]
    %v842 = vld [vmem:[#allocation11 + $0x94] sm:$0xf]
    %v843 = vld [vmem:[#allocation11 + $0x98] sm:$0xf]
    %v844 = vld [vmem:[#allocation11 + $0x9c] sm:$0xf]
    %v845 = vld [vmem:[#allocation11 + $0xa0] sm:$0xf]
    %v846 = vld [vmem:[#allocation11 + $0xa4] sm:$0xf]
    %v847 = vld [vmem:[#allocation11 + $0xa8] sm:$0xf]
    %v848 = vld [vmem:[#allocation11 + $0xac] sm:$0xf]
    %v849 = vld [vmem:[#allocation11 + $0xb0] sm:$0xf]
    %v850 = vld [vmem:[#allocation11 + $0xb4] sm:$0xf]
    %v851 = vld [vmem:[#allocation11 + $0xb8] sm:$0xf]
    %v852 = vld [vmem:[#allocation11 + $0xbc] sm:$0xf]
    %v853 = vld [vmem:[#allocation11 + $0xc0] sm:$0xf]
    %v854 = vld [vmem:[#allocation11 + $0xc4] sm:$0xf]
    %v855 = vld [vmem:[#allocation11 + $0xc8] sm:$0xf]
    %v856 = vld [vmem:[#allocation11 + $0xcc] sm:$0xf]
    %v857 = vld [vmem:[#allocation11 + $0xd0] sm:$0xf]
    %v858 = vld [vmem:[#allocation11 + $0xd4] sm:$0xf]
    %v859 = vld [vmem:[#allocation11 + $0xd8] sm:$0xf]
    %v860 = vld [vmem:[#allocation11 + $0xdc] sm:$0xf]
    %v861 = vld [vmem:[#allocation11 + $0xe0] sm:$0xf]
    %v862 = vld [vmem:[#allocation11 + $0xe4] sm:$0xf]
    %v863 = vld [vmem:[#allocation11 + $0xe8] sm:$0xf]
    %v864 = vld [vmem:[#allocation11 + $0xec] sm:$0xf]
    %v865 = vld [vmem:[#allocation11 + $0xf0] sm:$0xf]
    %v866 = vld [vmem:[#allocation11 + $0xf4] sm:$0xf]
    %v867 = vld [vmem:[#allocation11 + $0xf8] sm:$0xf]
    %v868 = vld [vmem:[#allocation11 + $0xfc] sm:$0xf]
    %v869 = vld [vmem:[#allocation11 + $0x100] sm:$0xf]
    %v870 = vld [vmem:[#allocation11 + $0x104] sm:$0xf]
    %v871 = vld [vmem:[#allocation11 + $0x108] sm:$0xf]
    %v872 = vld [vmem:[#allocation11 + $0x10c] sm:$0xf]
    %v873 = vld [vmem:[#allocation11 + $0x110] sm:$0xf]
    %v874 = vld [vmem:[#allocation11 + $0x114] sm:$0xf]
    %v875 = vld [vmem:[#allocation11 + $0x118] sm:$0xf]
    %v876 = vld [vmem:[#allocation11 + $0x11c] sm:$0xf]
    %v889 = vunpack.c.l.b16 %v793
    %v890 = vunpack.c.h.b16 %v793
    %v891 = vunpack.c.l.b16 %v794
    %v892 = vunpack.c.h.b16 %v794
    %v893 = vunpack.c.l.b16 %v795
    %v894 = vunpack.c.l.b16 %v796
    %v895 = vunpack.c.h.b16 %v796
    %v896 = vunpack.c.l.b16 %v797
    %v897 = vunpack.c.h.b16 %v797
    %v898 = vunpack.c.l.b16 %v798
    %v899 = vunpack.c.l.b16 %v799
    %v900 = vunpack.c.h.b16 %v799
    %v901 = vunpack.c.l.b16 %v800
    %v902 = vunpack.c.h.b16 %v800
    %v903 = vunpack.c.l.b16 %v801
    %v904 = vunpack.c.l.b16 %v802
    %v905 = vunpack.c.h.b16 %v802
    %v906 = vunpack.c.l.b16 %v803
    %v907 = vunpack.c.h.b16 %v803
    %v908 = vunpack.c.l.b16 %v804
    %v909 = vpack.c.b16 %v894, %v889
    %v910 = vpack.c.b16 %v895, %v890
    %v911 = vpack.c.b16 %v896, %v891
    %v912 = vpack.c.b16 %v897, %v892
    %v913 = vpack.c.b16 %v898, %v893
    %v914 = vpack.c.b16 %v904, %v899
    %v915 = vpack.c.b16 %v905, %v900
    %v916 = vpack.c.b16 %v906, %v901
    %v917 = vpack.c.b16 %v907, %v902
    %v918 = vpack.c.b16 %v908, %v903
    %v999 = vunpack.c.l.b16 %v805
    %v1000 = vunpack.c.l.b16 %v806
    %v1001 = vunpack.c.l.b16 %v807
    %v1002 = vunpack.c.l.b16 %v808
    %v1003 = vunpack.c.l.b16 %v809
    %v1004 = vunpack.c.l.b16 %v810
    %v1005 = vunpack.c.l.b16 %v811
    %v1006 = vunpack.c.l.b16 %v812
    %v1007 = vunpack.c.l.b16 %v813
    %v1008 = vunpack.c.l.b16 %v814
    %v1009 = vunpack.c.l.b16 %v815
    %v1010 = vunpack.c.l.b16 %v816
    %v1011 = vunpack.c.l.b16 %v817
    %v1012 = vunpack.c.l.b16 %v818
    %v1013 = vunpack.c.l.b16 %v819
    %v1014 = vunpack.c.l.b16 %v820
    %v1015 = vunpack.c.l.b16 %v821
    %v1016 = vunpack.c.l.b16 %v822
    %v1017 = vunpack.c.l.b16 %v823
    %v1018 = vunpack.c.l.b16 %v824
    %v1019 = vunpack.c.l.b16 %v825
    %v1020 = vunpack.c.l.b16 %v826
    %v1021 = vunpack.c.l.b16 %v827
    %v1022 = vunpack.c.l.b16 %v828
    %v1023 = vunpack.c.l.b16 %v829
    %v1024 = vunpack.c.l.b16 %v830
    %v1025 = vunpack.c.l.b16 %v831
    %v1026 = vunpack.c.l.b16 %v832
    %v1027 = vunpack.c.l.b16 %v833
    %v1028 = vunpack.c.l.b16 %v834
    %v1029 = vunpack.c.l.b16 %v835
    %v1030 = vunpack.c.l.b16 %v836
    %v1031 = vunpack.c.l.b16 %v837
    %v1032 = vunpack.c.l.b16 %v838
    %v1033 = vunpack.c.l.b16 %v839
    %v1034 = vunpack.c.l.b16 %v840
    %v1035 = vunpack.c.l.b16 %v841
    %v1036 = vunpack.c.l.b16 %v842
    %v1037 = vunpack.c.l.b16 %v843
    %v1038 = vunpack.c.l.b16 %v844
    %v1039 = vunpack.c.l.b16 %v845
    %v1040 = vunpack.c.l.b16 %v846
    %v1041 = vunpack.c.l.b16 %v847
    %v1042 = vunpack.c.l.b16 %v848
    %v1043 = vunpack.c.l.b16 %v849
    %v1044 = vunpack.c.l.b16 %v850
    %v1045 = vunpack.c.l.b16 %v851
    %v1046 = vunpack.c.l.b16 %v852
    %v1047 = vunpack.c.l.b16 %v853
    %v1048 = vunpack.c.l.b16 %v854
    %v1049 = vunpack.c.l.b16 %v855
    %v1050 = vunpack.c.l.b16 %v856
    %v1051 = vunpack.c.l.b16 %v857
    %v1052 = vunpack.c.l.b16 %v858
    %v1053 = vunpack.c.l.b16 %v859
    %v1054 = vunpack.c.l.b16 %v860
    %v1055 = vunpack.c.l.b16 %v861
    %v1056 = vunpack.c.l.b16 %v862
    %v1057 = vunpack.c.l.b16 %v863
    %v1058 = vunpack.c.l.b16 %v864
    %v1059 = vunpack.c.l.b16 %v865
    %v1060 = vunpack.c.l.b16 %v866
    %v1061 = vunpack.c.l.b16 %v867
    %v1062 = vunpack.c.l.b16 %v868
    %v1063 = vunpack.c.l.b16 %v869
    %v1064 = vunpack.c.l.b16 %v870
    %v1065 = vunpack.c.l.b16 %v871
    %v1066 = vunpack.c.l.b16 %v872
    %v1067 = vunpack.c.l.b16 %v873
    %v1068 = vunpack.c.l.b16 %v874
    %v1069 = vunpack.c.l.b16 %v875
    %v1070 = vunpack.c.l.b16 %v876
    %v1071 = vpack.c.b16 %v1000, %v999
    %v1072 = vpack.c.b16 %v1002, %v1001
    %v1073 = vpack.c.b16 %v1004, %v1003
    %v1074 = vpack.c.b16 %v1006, %v1005
    %v1075 = vpack.c.b16 %v1008, %v1007
    %v1076 = vpack.c.b16 %v1010, %v1009
    %v1077 = vpack.c.b16 %v1012, %v1011
    %v1078 = vpack.c.b16 %v1014, %v1013
    %v1079 = vpack.c.b16 %v1016, %v1015
    %v1080 = vpack.c.b16 %v1018, %v1017
    %v1081 = vpack.c.b16 %v1020, %v1019
    %v1082 = vpack.c.b16 %v1022, %v1021
    %v1083 = vpack.c.b16 %v1024, %v1023
    %v1084 = vpack.c.b16 %v1026, %v1025
    %v1085 = vpack.c.b16 %v1028, %v1027
    %v1086 = vpack.c.b16 %v1030, %v1029
    %v1087 = vpack.c.b16 %v1032, %v1031
    %v1088 = vpack.c.b16 %v1034, %v1033
    %v1089 = vpack.c.b16 %v1036, %v1035
    %v1090 = vpack.c.b16 %v1038, %v1037
    %v1091 = vpack.c.b16 %v1040, %v1039
    %v1092 = vpack.c.b16 %v1042, %v1041
    %v1093 = vpack.c.b16 %v1044, %v1043
    %v1094 = vpack.c.b16 %v1046, %v1045
    %v1095 = vpack.c.b16 %v1048, %v1047
    %v1096 = vpack.c.b16 %v1050, %v1049
    %v1097 = vpack.c.b16 %v1052, %v1051
    %v1098 = vpack.c.b16 %v1054, %v1053
    %v1099 = vpack.c.b16 %v1056, %v1055
    %v1100 = vpack.c.b16 %v1058, %v1057
    %v1101 = vpack.c.b16 %v1060, %v1059
    %v1102 = vpack.c.b16 %v1062, %v1061
    %v1103 = vpack.c.b16 %v1064, %v1063
    %v1104 = vpack.c.b16 %v1066, %v1065
    %v1105 = vpack.c.b16 %v1068, %v1067
    %v1106 = vpack.c.b16 %v1070, %v1069
    %v1144 = vsel %vm218, %v913, 0
    %v1147 = vsel %vm218, %v918, 0
    %1149 = vmatprep.subr.bf16.mxu0 0
    %1150 = vmatpush1.bf16.msra.mxu0 %v1078
    %1151 = vmatprep.subr.bf16.mxu0 0
    %1152 = vmatpush1.bf16.msra.mxu0 %v1077
    %1153 = vmatprep.subr.bf16.mxu0 0
    %1154 = vmatpush1.bf16.msra.mxu0 %v1076
    %1155 = vmatprep.subr.bf16.mxu0 0
    %1156 = vmatpush1.bf16.msra.mxu0 %v1075
    %1157 = vmatprep.subr.bf16.mxu0 0
    %1158 = vmatpush1.bf16.msra.mxu0 %v1074
    %1159 = vmatprep.subr.bf16.mxu0 0
    %1160 = vmatpush1.bf16.msra.mxu0 %v1073
    %1161 = vmatprep.subr.bf16.mxu0 0
    %1162 = vmatpush1.bf16.msra.mxu0 %v1072
    %1163 = vmatprep.subr.bf16.mxu0 0
    %1164 = vmatpush1.bf16.msra.mxu0 %v1071
    %1165 = vmatprep.subr.bf16.mxu0 0
    %1166 = vmatpush2.bf16.msra.mxu0 %v1086
    %1167 = vmatprep.subr.bf16.mxu0 0
    %1168 = vmatpush2.bf16.msra.mxu0 %v1085
    %1169 = vmatprep.subr.bf16.mxu0 0
    %1170 = vmatpush2.bf16.msra.mxu0 %v1084
    %1171 = vmatprep.subr.bf16.mxu0 0
    %1172 = vmatpush2.bf16.msra.mxu0 %v1083
    %1173 = vmatprep.subr.bf16.mxu0 0
    %1174 = vmatpush2.bf16.msra.mxu0 %v1082
    %1175 = vmatprep.subr.bf16.mxu0 0
    %1176 = vmatpush2.bf16.msra.mxu0 %v1081
    %1177 = vmatprep.subr.bf16.mxu0 0
    %1178 = vmatpush2.bf16.msra.mxu0 %v1080
    %1179 = vmatprep.subr.bf16.mxu0 0
    %1180 = vmatpush2.bf16.msra.mxu0 %v1079
    %1181 = vmatprep.mubr.bf16.mxu0 %v910
    %1182 = vmatmul.mubr.bf16.gmra.mxu0 %v909
    %v1183 = vpop.f32.mrf.mxu0
    %v1184 = vadd.f32 0.0, %v1183
    %v1185 = vpop.f32.mrf.mxu0
    %v1186 = vpop.f32.mrf.mxu0
    %v1187 = vadd.f32 0.0, %v1186
    %v1188 = vpop.f32.mrf.mxu0
    %1189 = vmatprep.mubr.bf16.mxu0 %v915
    %1190 = vmatmul.mubr.bf16.gmra.mxu0 %v914
    %v1191 = vpop.f32.mrf.mxu0
    %v1192 = vadd.f32 0.0, %v1191
    %v1193 = vpop.f32.mrf.mxu0
    %v1194 = vpop.f32.mrf.mxu0
    %v1195 = vadd.f32 0.0, %v1194
    %v1196 = vpop.f32.mrf.mxu0
    %1197 = vdwg.mxu0
    %1198 = vmatprep.subr.bf16.mxu0 0
    %1199 = vmatpush1.bf16.msra.mxu0 %v1094
    %1200 = vmatprep.subr.bf16.mxu0 0
    %1201 = vmatpush1.bf16.msra.mxu0 %v1093
    %1202 = vmatprep.subr.bf16.mxu0 0
    %1203 = vmatpush1.bf16.msra.mxu0 %v1092
    %1204 = vmatprep.subr.bf16.mxu0 0
    %1205 = vmatpush1.bf16.msra.mxu0 %v1091
    %1206 = vmatprep.subr.bf16.mxu0 0
    %1207 = vmatpush1.bf16.msra.mxu0 %v1090
    %1208 = vmatprep.subr.bf16.mxu0 0
    %1209 = vmatpush1.bf16.msra.mxu0 %v1089
    %1210 = vmatprep.subr.bf16.mxu0 0
    %1211 = vmatpush1.bf16.msra.mxu0 %v1088
    %1212 = vmatprep.subr.bf16.mxu0 0
    %1213 = vmatpush1.bf16.msra.mxu0 %v1087
    %1214 = vmatprep.subr.bf16.mxu0 0
    %1215 = vmatpush2.bf16.msra.mxu0 %v1102
    %1216 = vmatprep.subr.bf16.mxu0 0
    %1217 = vmatpush2.bf16.msra.mxu0 %v1101
    %1218 = vmatprep.subr.bf16.mxu0 0
    %1219 = vmatpush2.bf16.msra.mxu0 %v1100
    %1220 = vmatprep.subr.bf16.mxu0 0
    %1221 = vmatpush2.bf16.msra.mxu0 %v1099
    %1222 = vmatprep.subr.bf16.mxu0 0
    %1223 = vmatpush2.bf16.msra.mxu0 %v1098
    %1224 = vmatprep.subr.bf16.mxu0 0
    %1225 = vmatpush2.bf16.msra.mxu0 %v1097
    %1226 = vmatprep.subr.bf16.mxu0 0
    %1227 = vmatpush2.bf16.msra.mxu0 %v1096
    %1228 = vmatprep.subr.bf16.mxu0 0
    %1229 = vmatpush2.bf16.msra.mxu0 %v1095
    %1230 = vmatprep.mubr.bf16.mxu0 %v912
    %1231 = vmatmul.mubr.bf16.gmra.mxu0 %v911
    %v1232 = vpop.f32.mrf.mxu0
    %v1233 = vadd.f32 %v1184, %v1232
    %v1234 = vpop.f32.mrf.mxu0
    %v1235 = vpop.f32.mrf.mxu0
    %v1236 = vadd.f32 %v1187, %v1235
    %v1237 = vpop.f32.mrf.mxu0
    %1238 = vmatprep.mubr.bf16.mxu0 %v917
    %1239 = vmatmul.mubr.bf16.gmra.mxu0 %v916
    %v1240 = vpop.f32.mrf.mxu0
    %v1241 = vadd.f32 %v1192, %v1240
    %v1242 = vpop.f32.mrf.mxu0
    %v1243 = vpop.f32.mrf.mxu0
    %v1244 = vadd.f32 %v1195, %v1243
    %v1245 = vpop.f32.mrf.mxu0
    %1246 = vdwg.mxu0
    %1247 = vmatprep.subr.bf16.mxu0 0
    %1248 = vmatpush1.bf16.msra.mxu0 0
    %1249 = vmatprep.subr.bf16.mxu0 0
    %1250 = vmatpush1.bf16.msra.mxu0 0
    %1251 = vmatprep.subr.bf16.mxu0 0
    %1252 = vmatpush1.bf16.msra.mxu0 0
    %1253 = vmatprep.subr.bf16.mxu0 0
    %1254 = vmatpush1.bf16.msra.mxu0 0
    %1255 = vmatprep.subr.bf16.mxu0 0
    %1256 = vmatpush1.bf16.msra.mxu0 %v1106
    %1257 = vmatprep.subr.bf16.mxu0 0
    %1258 = vmatpush1.bf16.msra.mxu0 %v1105
    %1259 = vmatprep.subr.bf16.mxu0 0
    %1260 = vmatpush1.bf16.msra.mxu0 %v1104
    %1261 = vmatprep.subr.bf16.mxu0 0
    %1262 = vmatpush1.bf16.msra.mxu0 %v1103
    %1263 = vmatprep.subr.bf16.mxu0 0
    %1264 = vmatpush2.bf16.msra.mxu0 0
    %1265 = vmatprep.subr.bf16.mxu0 0
    %1266 = vmatpush2.bf16.msra.mxu0 0
    %1267 = vmatprep.subr.bf16.mxu0 0
    %1268 = vmatpush2.bf16.msra.mxu0 0
    %1269 = vmatprep.subr.bf16.mxu0 0
    %1270 = vmatpush2.bf16.msra.mxu0 0
    %1271 = vmatprep.subr.bf16.mxu0 0
    %1272 = vmatpush2.bf16.msra.mxu0 0
    %1273 = vmatprep.subr.bf16.mxu0 0
    %1274 = vmatpush2.bf16.msra.mxu0 0
    %1275 = vmatprep.subr.bf16.mxu0 0
    %1276 = vmatpush2.bf16.msra.mxu0 0
    %1277 = vmatprep.subr.bf16.mxu0 0
    %1278 = vmatpush2.bf16.msra.mxu0 0
    %1279 = vmatprep.mubr.bf16.mxu0 0
    %1280 = vmatmul.mubr.bf16.gmra.mxu0 %v1144
    %v1281 = vpop.f32.mrf.mxu0
    %v1282 = vadd.f32 %v1233, %v1281
    %v1283 = vpop.f32.mrf.mxu0
    %v1284 = vpop.f32.mrf.mxu0
    %v1285 = vadd.f32 %v1236, %v1284
    %v1286 = vpop.f32.mrf.mxu0
    %1287 = vmatprep.mubr.bf16.mxu0 0
    %1288 = vmatmul.mubr.bf16.gmra.mxu0 %v1147
    %v1289 = vpop.f32.mrf.mxu0
    %v1290 = vadd.f32 %v1241, %v1289
    %v1291 = vpop.f32.mrf.mxu0
    %v1292 = vpop.f32.mrf.mxu0
    %v1293 = vadd.f32 %v1244, %v1292
    %v1294 = vpop.f32.mrf.mxu0
    %1295 = vdwg.mxu0
    %v1296 = vmax.f32 %v1282, 0.0
    %v1297 = vmax.f32 %v1285, 0.0
    %v1298 = vmax.f32 %v1290, 0.0
    %v1299 = vmax.f32 %v1293, 0.0
    %v1300 = vunpack.c.l.bf16 %v156
    %v1301 = vunpack.c.l.bf16 %v157
    %v1302 = vunpack.c.l.bf16 %v158
    %v1303 = vunpack.c.l.bf16 %v159
    %v1304 = vsel %vm218, %v1300, 0.0
    %v1305 = vsel %vm218, %v1301, 0.0
    %v1306 = vadd.f32 %v1304, %v1305
    %v1307 = vrot.slane %v1306, 4
    %v1308 = vadd.f32 %v1306, %v1307
    %v1309 = vrot.slane %v1308, 2
    %v1310 = vadd.f32 %v1308, %v1309
    %v1311 = vrot.slane %v1310, 1
    %v1312 = vadd.f32 %v1310, %v1311
    %v1313 = vsel %vm218, %v1302, 0.0
    %v1314 = vsel %vm218, %v1303, 0.0
    %v1315 = vadd.f32 %v1313, %v1314
    %v1316 = vrot.slane %v1315, 4
    %v1317 = vadd.f32 %v1315, %v1316
    %v1318 = vrot.slane %v1317, 2
    %v1319 = vadd.f32 %v1317, %v1318
    %v1320 = vrot.slane %v1319, 1
    %v1321 = vadd.f32 %v1319, %v1320
    %v1322 = vpack.c.bf16 %v1312, %v1312
    %v1323 = vpack.c.bf16 %v1321, %v1321
    %v1324 = vld [vmem:[#allocation13] sm:$0xf]
    %v1325 = vld [vmem:[#allocation13 + $0x4] sm:$0xf]
    %v1326 = vld [vmem:[#allocation13 + $0x8] sm:$0xf]
    %v1327 = vld [vmem:[#allocation13 + $0xc] sm:$0xf]
    %v1328 = vld [vmem:[#allocation13 + $0x10] sm:$0xf]
    %v1329 = vld [vmem:[#allocation13 + $0x14] sm:$0xf]
    %v1330 = vld [vmem:[#allocation13 + $0x18] sm:$0xf]
    %v1331 = vld [vmem:[#allocation13 + $0x1c] sm:$0xf]
    %v1334 = vunpack.c.l.b16 %v1322
    %v1335 = vunpack.c.l.b16 %v1323
    %vm1336 = vcmask 1041409
    %v1337 = vsel %vm1336, %v1335, %v1334
    %v1338 = vpack.c.b16 %v1337, %v1337
    %v1347 = vunpack.c.l.b16 %v1324
    %v1348 = vunpack.c.l.b16 %v1325
    %v1349 = vunpack.c.l.b16 %v1326
    %v1350 = vunpack.c.l.b16 %v1327
    %v1351 = vunpack.c.l.b16 %v1328
    %v1352 = vunpack.c.l.b16 %v1329
    %v1353 = vunpack.c.l.b16 %v1330
    %v1354 = vunpack.c.l.b16 %v1331
    %v1355 = vpack.c.b16 %v1348, %v1347
    %v1356 = vpack.c.b16 %v1350, %v1349
    %v1357 = vpack.c.b16 %v1352, %v1351
    %v1358 = vpack.c.b16 %v1354, %v1353
    %v1364 = vsel %vm218, %v1338, 0
    %1366 = vmatprep.subr.bf16.mxu0 0
    %1367 = vmatpush1.bf16.msra.mxu0 0
    %1368 = vmatprep.subr.bf16.mxu0 0
    %1369 = vmatpush1.bf16.msra.mxu0 0
    %1370 = vmatprep.subr.bf16.mxu0 0
    %1371 = vmatpush1.bf16.msra.mxu0 0
    %1372 = vmatprep.subr.bf16.mxu0 0
    %1373 = vmatpush1.bf16.msra.mxu0 0
    %1374 = vmatprep.subr.bf16.mxu0 0
    %1375 = vmatpush1.bf16.msra.mxu0 %v1358
    %1376 = vmatprep.subr.bf16.mxu0 0
    %1377 = vmatpush1.bf16.msra.mxu0 %v1357
    %1378 = vmatprep.subr.bf16.mxu0 0
    %1379 = vmatpush1.bf16.msra.mxu0 %v1356
    %1380 = vmatprep.subr.bf16.mxu0 0
    %1381 = vmatpush1.bf16.msra.mxu0 %v1355
    %1382 = vmatprep.subr.bf16.mxu0 0
    %1383 = vmatpush2.bf16.msra.mxu0 0
    %1384 = vmatprep.subr.bf16.mxu0 0
    %1385 = vmatpush2.bf16.msra.mxu0 0
    %1386 = vmatprep.subr.bf16.mxu0 0
    %1387 = vmatpush2.bf16.msra.mxu0 0
    %1388 = vmatprep.subr.bf16.mxu0 0
    %1389 = vmatpush2.bf16.msra.mxu0 0
    %1390 = vmatprep.subr.bf16.mxu0 0
    %1391 = vmatpush2.bf16.msra.mxu0 0
    %1392 = vmatprep.subr.bf16.mxu0 0
    %1393 = vmatpush2.bf16.msra.mxu0 0
    %1394 = vmatprep.subr.bf16.mxu0 0
    %1395 = vmatpush2.bf16.msra.mxu0 0
    %1396 = vmatprep.subr.bf16.mxu0 0
    %1397 = vmatpush2.bf16.msra.mxu0 0
    %1398 = vmatprep.mubr.bf16.mxu0 0
    %1399 = vmatmul.mubr.bf16.gmra.mxu0 %v1364
    %v1400 = vpop.f32.mrf.mxu0
    %v1401 = vadd.f32 0.0, %v1400
    %v1402 = vpop.f32.mrf.mxu0
    %v1403 = vpop.f32.mrf.mxu0
    %v1404 = vpop.f32.mrf.mxu0
    %1405 = vdwg.mxu0
    %v1406 = vmax.f32 %v1401, 0.0
    %v1407 = vpack.c.bf16 %v280, %v278
    %v1408 = vpack.c.bf16 %v281, %v279
    %v1409 = vpack.c.bf16 %v790, %v789
    %v1410 = vpack.c.bf16 %v1297, %v1296
    %v1411 = vpack.c.bf16 %v284, %v282
    %v1412 = vpack.c.bf16 %v285, %v283
    %v1413 = vpack.c.bf16 %v792, %v791
    %v1414 = vpack.c.bf16 %v1299, %v1298
    %v1415 = vld [vmem:[#allocation14] sm:$0xf]
    %v1416 = vld [vmem:[#allocation14 + $0x4] sm:$0xf]
    %v1417 = vld [vmem:[#allocation14 + $0x8] sm:$0xf]
    %v1418 = vld [vmem:[#allocation14 + $0xc] sm:$0xf]
    %v1419 = vld [vmem:[#allocation14 + $0x10] sm:$0xf]
    %v1420 = vld [vmem:[#allocation14 + $0x14] sm:$0xf]
    %v1421 = vld [vmem:[#allocation14 + $0x18] sm:$0xf]
    %v1422 = vld [vmem:[#allocation14 + $0x1c] sm:$0xf]
    %v1423 = vld [vmem:[#allocation14 + $0x20] sm:$0xf]
    %v1424 = vld [vmem:[#allocation14 + $0x24] sm:$0xf]
    %v1425 = vld [vmem:[#allocation14 + $0x28] sm:$0xf]
    %v1426 = vld [vmem:[#allocation14 + $0x2c] sm:$0xf]
    %v1427 = vld [vmem:[#allocation14 + $0x30] sm:$0xf]
    %v1428 = vld [vmem:[#allocation14 + $0x34] sm:$0xf]
    %v1429 = vld [vmem:[#allocation14 + $0x38] sm:$0xf]
    %v1430 = vld [vmem:[#allocation14 + $0x3c] sm:$0xf]
    %v1431 = vld [vmem:[#allocation14 + $0x40] sm:$0xf]
    %v1432 = vld [vmem:[#allocation14 + $0x44] sm:$0xf]
    %v1433 = vld [vmem:[#allocation14 + $0x48] sm:$0xf]
    %v1434 = vld [vmem:[#allocation14 + $0x4c] sm:$0xf]
    %v1435 = vld [vmem:[#allocation14 + $0x50] sm:$0xf]
    %v1436 = vld [vmem:[#allocation14 + $0x54] sm:$0xf]
    %v1437 = vld [vmem:[#allocation14 + $0x58] sm:$0xf]
    %v1438 = vld [vmem:[#allocation14 + $0x5c] sm:$0xf]
    %v1439 = vld [vmem:[#allocation14 + $0x60] sm:$0xf]
    %v1440 = vld [vmem:[#allocation14 + $0x64] sm:$0xf]
    %v1441 = vld [vmem:[#allocation14 + $0x68] sm:$0xf]
    %v1442 = vld [vmem:[#allocation14 + $0x6c] sm:$0xf]
    %v1443 = vld [vmem:[#allocation14 + $0x70] sm:$0xf]
    %v1444 = vld [vmem:[#allocation14 + $0x74] sm:$0xf]
    %v1445 = vld [vmem:[#allocation14 + $0x78] sm:$0xf]
    %v1446 = vld [vmem:[#allocation14 + $0x7c] sm:$0xf]
    %v1447 = vld [vmem:[#allocation14 + $0x80] sm:$0xf]
    %v1448 = vld [vmem:[#allocation14 + $0x84] sm:$0xf]
    %v1449 = vld [vmem:[#allocation14 + $0x88] sm:$0xf]
    %v1450 = vld [vmem:[#allocation14 + $0x8c] sm:$0xf]
    %v1451 = vld [vmem:[#allocation14 + $0x90] sm:$0xf]
    %v1452 = vld [vmem:[#allocation14 + $0x94] sm:$0xf]
    %v1453 = vld [vmem:[#allocation14 + $0x98] sm:$0xf]
    %v1454 = vld [vmem:[#allocation14 + $0x9c] sm:$0xf]
    %v1455 = vld [vmem:[#allocation14 + $0xa0] sm:$0xf]
    %v1456 = vld [vmem:[#allocation14 + $0xa4] sm:$0xf]
    %v1457 = vld [vmem:[#allocation14 + $0xa8] sm:$0xf]
    %v1458 = vld [vmem:[#allocation14 + $0xac] sm:$0xf]
    %v1459 = vld [vmem:[#allocation14 + $0xb0] sm:$0xf]
    %v1460 = vld [vmem:[#allocation14 + $0xb4] sm:$0xf]
    %v1461 = vld [vmem:[#allocation14 + $0xb8] sm:$0xf]
    %v1462 = vld [vmem:[#allocation14 + $0xbc] sm:$0xf]
    %v1463 = vld [vmem:[#allocation14 + $0xc0] sm:$0xf]
    %v1464 = vld [vmem:[#allocation14 + $0xc4] sm:$0xf]
    %v1465 = vld [vmem:[#allocation14 + $0xc8] sm:$0xf]
    %v1466 = vld [vmem:[#allocation14 + $0xcc] sm:$0xf]
    %v1467 = vld [vmem:[#allocation14 + $0xd0] sm:$0xf]
    %v1468 = vld [vmem:[#allocation14 + $0xd4] sm:$0xf]
    %v1469 = vld [vmem:[#allocation14 + $0xd8] sm:$0xf]
    %v1470 = vld [vmem:[#allocation14 + $0xdc] sm:$0xf]
    %v1471 = vld [vmem:[#allocation14 + $0xe0] sm:$0xf]
    %v1472 = vld [vmem:[#allocation14 + $0xe4] sm:$0xf]
    %v1473 = vld [vmem:[#allocation14 + $0xe8] sm:$0xf]
    %v1474 = vld [vmem:[#allocation14 + $0xec] sm:$0xf]
    %v1475 = vld [vmem:[#allocation14 + $0xf0] sm:$0xf]
    %v1476 = vld [vmem:[#allocation14 + $0xf4] sm:$0xf]
    %v1477 = vld [vmem:[#allocation14 + $0xf8] sm:$0xf]
    %v1478 = vld [vmem:[#allocation14 + $0xfc] sm:$0xf]
    %v1543 = vunpack.c.l.b16 %v1415
    %v1544 = vunpack.c.l.b16 %v1416
    %v1545 = vunpack.c.l.b16 %v1417
    %v1546 = vunpack.c.l.b16 %v1418
    %v1547 = vunpack.c.l.b16 %v1419
    %v1548 = vunpack.c.l.b16 %v1420
    %v1549 = vunpack.c.l.b16 %v1421
    %v1550 = vunpack.c.l.b16 %v1422
    %v1551 = vunpack.c.l.b16 %v1423
    %v1552 = vunpack.c.l.b16 %v1424
    %v1553 = vunpack.c.l.b16 %v1425
    %v1554 = vunpack.c.l.b16 %v1426
    %v1555 = vunpack.c.l.b16 %v1427
    %v1556 = vunpack.c.l.b16 %v1428
    %v1557 = vunpack.c.l.b16 %v1429
    %v1558 = vunpack.c.l.b16 %v1430
    %v1559 = vunpack.c.l.b16 %v1431
    %v1560 = vunpack.c.l.b16 %v1432
    %v1561 = vunpack.c.l.b16 %v1433
    %v1562 = vunpack.c.l.b16 %v1434
    %v1563 = vunpack.c.l.b16 %v1435
    %v1564 = vunpack.c.l.b16 %v1436
    %v1565 = vunpack.c.l.b16 %v1437
    %v1566 = vunpack.c.l.b16 %v1438
    %v1567 = vunpack.c.l.b16 %v1439
    %v1568 = vunpack.c.l.b16 %v1440
    %v1569 = vunpack.c.l.b16 %v1441
    %v1570 = vunpack.c.l.b16 %v1442
    %v1571 = vunpack.c.l.b16 %v1443
    %v1572 = vunpack.c.l.b16 %v1444
    %v1573 = vunpack.c.l.b16 %v1445
    %v1574 = vunpack.c.l.b16 %v1446
    %v1575 = vunpack.c.l.b16 %v1447
    %v1576 = vunpack.c.l.b16 %v1448
    %v1577 = vunpack.c.l.b16 %v1449
    %v1578 = vunpack.c.l.b16 %v1450
    %v1579 = vunpack.c.l.b16 %v1451
    %v1580 = vunpack.c.l.b16 %v1452
    %v1581 = vunpack.c.l.b16 %v1453
    %v1582 = vunpack.c.l.b16 %v1454
    %v1583 = vunpack.c.l.b16 %v1455
    %v1584 = vunpack.c.l.b16 %v1456
    %v1585 = vunpack.c.l.b16 %v1457
    %v1586 = vunpack.c.l.b16 %v1458
    %v1587 = vunpack.c.l.b16 %v1459
    %v1588 = vunpack.c.l.b16 %v1460
    %v1589 = vunpack.c.l.b16 %v1461
    %v1590 = vunpack.c.l.b16 %v1462
    %v1591 = vunpack.c.l.b16 %v1463
    %v1592 = vunpack.c.l.b16 %v1464
    %v1593 = vunpack.c.l.b16 %v1465
    %v1594 = vunpack.c.l.b16 %v1466
    %v1595 = vunpack.c.l.b16 %v1467
    %v1596 = vunpack.c.l.b16 %v1468
    %v1597 = vunpack.c.l.b16 %v1469
    %v1598 = vunpack.c.l.b16 %v1470
    %v1599 = vunpack.c.l.b16 %v1471
    %v1600 = vunpack.c.l.b16 %v1472
    %v1601 = vunpack.c.l.b16 %v1473
    %v1602 = vunpack.c.l.b16 %v1474
    %v1603 = vunpack.c.l.b16 %v1475
    %v1604 = vunpack.c.l.b16 %v1476
    %v1605 = vunpack.c.l.b16 %v1477
    %v1606 = vunpack.c.l.b16 %v1478
    %v1607 = vpack.c.b16 %v1544, %v1543
    %v1608 = vpack.c.b16 %v1546, %v1545
    %v1609 = vpack.c.b16 %v1548, %v1547
    %v1610 = vpack.c.b16 %v1550, %v1549
    %v1611 = vpack.c.b16 %v1552, %v1551
    %v1612 = vpack.c.b16 %v1554, %v1553
    %v1613 = vpack.c.b16 %v1556, %v1555
    %v1614 = vpack.c.b16 %v1558, %v1557
    %v1615 = vpack.c.b16 %v1560, %v1559
    %v1616 = vpack.c.b16 %v1562, %v1561
    %v1617 = vpack.c.b16 %v1564, %v1563
    %v1618 = vpack.c.b16 %v1566, %v1565
    %v1619 = vpack.c.b16 %v1568, %v1567
    %v1620 = vpack.c.b16 %v1570, %v1569
    %v1621 = vpack.c.b16 %v1572, %v1571
    %v1622 = vpack.c.b16 %v1574, %v1573
    %v1623 = vpack.c.b16 %v1576, %v1575
    %v1624 = vpack.c.b16 %v1578, %v1577
    %v1625 = vpack.c.b16 %v1580, %v1579
    %v1626 = vpack.c.b16 %v1582, %v1581
    %v1627 = vpack.c.b16 %v1584, %v1583
    %v1628 = vpack.c.b16 %v1586, %v1585
    %v1629 = vpack.c.b16 %v1588, %v1587
    %v1630 = vpack.c.b16 %v1590, %v1589
    %v1631 = vpack.c.b16 %v1592, %v1591
    %v1632 = vpack.c.b16 %v1594, %v1593
    %v1633 = vpack.c.b16 %v1596, %v1595
    %v1634 = vpack.c.b16 %v1598, %v1597
    %v1635 = vpack.c.b16 %v1600, %v1599
    %v1636 = vpack.c.b16 %v1602, %v1601
    %v1637 = vpack.c.b16 %v1604, %v1603
    %v1638 = vpack.c.b16 %v1606, %v1605
    %1671 = vmatprep.subr.bf16.mxu0 0
    %1672 = vmatpush1.bf16.msra.mxu0 %v1614
    %1673 = vmatprep.subr.bf16.mxu0 0
    %1674 = vmatpush1.bf16.msra.mxu0 %v1613
    %1675 = vmatprep.subr.bf16.mxu0 0
    %1676 = vmatpush1.bf16.msra.mxu0 %v1612
    %1677 = vmatprep.subr.bf16.mxu0 0
    %1678 = vmatpush1.bf16.msra.mxu0 %v1611
    %1679 = vmatprep.subr.bf16.mxu0 0
    %1680 = vmatpush1.bf16.msra.mxu0 %v1610
    %1681 = vmatprep.subr.bf16.mxu0 0
    %1682 = vmatpush1.bf16.msra.mxu0 %v1609
    %1683 = vmatprep.subr.bf16.mxu0 0
    %1684 = vmatpush1.bf16.msra.mxu0 %v1608
    %1685 = vmatprep.subr.bf16.mxu0 0
    %1686 = vmatpush1.bf16.msra.mxu0 %v1607
    %1687 = vmatprep.subr.bf16.mxu0 0
    %1688 = vmatpush2.bf16.msra.mxu0 %v1622
    %1689 = vmatprep.subr.bf16.mxu0 0
    %1690 = vmatpush2.bf16.msra.mxu0 %v1621
    %1691 = vmatprep.subr.bf16.mxu0 0
    %1692 = vmatpush2.bf16.msra.mxu0 %v1620
    %1693 = vmatprep.subr.bf16.mxu0 0
    %1694 = vmatpush2.bf16.msra.mxu0 %v1619
    %1695 = vmatprep.subr.bf16.mxu0 0
    %1696 = vmatpush2.bf16.msra.mxu0 %v1618
    %1697 = vmatprep.subr.bf16.mxu0 0
    %1698 = vmatpush2.bf16.msra.mxu0 %v1617
    %1699 = vmatprep.subr.bf16.mxu0 0
    %1700 = vmatpush2.bf16.msra.mxu0 %v1616
    %1701 = vmatprep.subr.bf16.mxu0 0
    %1702 = vmatpush2.bf16.msra.mxu0 %v1615
    %1703 = vmatprep.mubr.bf16.mxu0 %v1408
    %1704 = vmatmul.mubr.bf16.gmra.mxu0 %v1407
    %v1705 = vpop.f32.mrf.mxu0
    %v1706 = vadd.f32 0.0, %v1705
    %v1707 = vpop.f32.mrf.mxu0
    %v1708 = vpop.f32.mrf.mxu0
    %v1709 = vadd.f32 0.0, %v1708
    %v1710 = vpop.f32.mrf.mxu0
    %1711 = vmatprep.mubr.bf16.mxu0 %v1412
    %1712 = vmatmul.mubr.bf16.gmra.mxu0 %v1411
    %v1713 = vpop.f32.mrf.mxu0
    %v1714 = vadd.f32 0.0, %v1713
    %v1715 = vpop.f32.mrf.mxu0
    %v1716 = vpop.f32.mrf.mxu0
    %v1717 = vadd.f32 0.0, %v1716
    %v1718 = vpop.f32.mrf.mxu0
    %1719 = vdwg.mxu0
    %1720 = vmatprep.subr.bf16.mxu0 0
    %1721 = vmatpush1.bf16.msra.mxu0 %v1630
    %1722 = vmatprep.subr.bf16.mxu0 0
    %1723 = vmatpush1.bf16.msra.mxu0 %v1629
    %1724 = vmatprep.subr.bf16.mxu0 0
    %1725 = vmatpush1.bf16.msra.mxu0 %v1628
    %1726 = vmatprep.subr.bf16.mxu0 0
    %1727 = vmatpush1.bf16.msra.mxu0 %v1627
    %1728 = vmatprep.subr.bf16.mxu0 0
    %1729 = vmatpush1.bf16.msra.mxu0 %v1626
    %1730 = vmatprep.subr.bf16.mxu0 0
    %1731 = vmatpush1.bf16.msra.mxu0 %v1625
    %1732 = vmatprep.subr.bf16.mxu0 0
    %1733 = vmatpush1.bf16.msra.mxu0 %v1624
    %1734 = vmatprep.subr.bf16.mxu0 0
    %1735 = vmatpush1.bf16.msra.mxu0 %v1623
    %1736 = vmatprep.subr.bf16.mxu0 0
    %1737 = vmatpush2.bf16.msra.mxu0 %v1638
    %1738 = vmatprep.subr.bf16.mxu0 0
    %1739 = vmatpush2.bf16.msra.mxu0 %v1637
    %1740 = vmatprep.subr.bf16.mxu0 0
    %1741 = vmatpush2.bf16.msra.mxu0 %v1636
    %1742 = vmatprep.subr.bf16.mxu0 0
    %1743 = vmatpush2.bf16.msra.mxu0 %v1635
    %1744 = vmatprep.subr.bf16.mxu0 0
    %1745 = vmatpush2.bf16.msra.mxu0 %v1634
    %1746 = vmatprep.subr.bf16.mxu0 0
    %1747 = vmatpush2.bf16.msra.mxu0 %v1633
    %1748 = vmatprep.subr.bf16.mxu0 0
    %1749 = vmatpush2.bf16.msra.mxu0 %v1632
    %1750 = vmatprep.subr.bf16.mxu0 0
    %1751 = vmatpush2.bf16.msra.mxu0 %v1631
    %1752 = vmatprep.mubr.bf16.mxu0 %v1410
    %1753 = vmatmul.mubr.bf16.gmra.mxu0 %v1409
    %v1754 = vpop.f32.mrf.mxu0
    %v1755 = vadd.f32 %v1706, %v1754
    %v1756 = vpop.f32.mrf.mxu0
    %v1757 = vpop.f32.mrf.mxu0
    %v1758 = vadd.f32 %v1709, %v1757
    %v1759 = vpop.f32.mrf.mxu0
    %1760 = vmatprep.mubr.bf16.mxu0 %v1414
    %1761 = vmatmul.mubr.bf16.gmra.mxu0 %v1413
    %v1762 = vpop.f32.mrf.mxu0
    %v1763 = vadd.f32 %v1714, %v1762
    %v1764 = vpop.f32.mrf.mxu0
    %v1765 = vpop.f32.mrf.mxu0
    %v1766 = vadd.f32 %v1717, %v1765
    %v1767 = vpop.f32.mrf.mxu0
    %1768 = vdwg.mxu0
    %v1769 = vpack.c.bf16 %v1406, %v1406
    %v1770 = vld [vmem:[#allocation16] sm:$0xf]
    %v1771 = vld [vmem:[#allocation16 + $0x4] sm:$0xf]
    %v1772 = vld [vmem:[#allocation16 + $0x8] sm:$0xf]
    %v1773 = vld [vmem:[#allocation16 + $0xc] sm:$0xf]
    %v1774 = vld [vmem:[#allocation16 + $0x10] sm:$0xf]
    %v1775 = vld [vmem:[#allocation16 + $0x14] sm:$0xf]
    %v1776 = vld [vmem:[#allocation16 + $0x18] sm:$0xf]
    %v1777 = vld [vmem:[#allocation16 + $0x1c] sm:$0xf]
    %v1778 = vld [vmem:[#allocation16 + $0x20] sm:$0xf]
    %v1779 = vld [vmem:[#allocation16 + $0x24] sm:$0xf]
    %v1780 = vld [vmem:[#allocation16 + $0x28] sm:$0xf]
    %v1781 = vld [vmem:[#allocation16 + $0x2c] sm:$0xf]
    %v1782 = vld [vmem:[#allocation16 + $0x30] sm:$0xf]
    %v1783 = vld [vmem:[#allocation16 + $0x34] sm:$0xf]
    %v1784 = vld [vmem:[#allocation16 + $0x38] sm:$0xf]
    %v1785 = vld [vmem:[#allocation16 + $0x3c] sm:$0xf]
    %v1802 = vunpack.c.l.b16 %v1770
    %v1803 = vunpack.c.l.b16 %v1771
    %v1804 = vunpack.c.l.b16 %v1772
    %v1805 = vunpack.c.l.b16 %v1773
    %v1806 = vunpack.c.l.b16 %v1774
    %v1807 = vunpack.c.l.b16 %v1775
    %v1808 = vunpack.c.l.b16 %v1776
    %v1809 = vunpack.c.l.b16 %v1777
    %v1810 = vunpack.c.l.b16 %v1778
    %v1811 = vunpack.c.l.b16 %v1779
    %v1812 = vunpack.c.l.b16 %v1780
    %v1813 = vunpack.c.l.b16 %v1781
    %v1814 = vunpack.c.l.b16 %v1782
    %v1815 = vunpack.c.l.b16 %v1783
    %v1816 = vunpack.c.l.b16 %v1784
    %v1817 = vunpack.c.l.b16 %v1785
    %v1818 = vpack.c.b16 %v1803, %v1802
    %v1819 = vpack.c.b16 %v1805, %v1804
    %v1820 = vpack.c.b16 %v1807, %v1806
    %v1821 = vpack.c.b16 %v1809, %v1808
    %v1822 = vpack.c.b16 %v1811, %v1810
    %v1823 = vpack.c.b16 %v1813, %v1812
    %v1824 = vpack.c.b16 %v1815, %v1814
    %v1825 = vpack.c.b16 %v1817, %v1816
    %1834 = vmatprep.subr.bf16.mxu0 0
    %1835 = vmatpush1.bf16.msra.mxu0 %v1825
    %1836 = vmatprep.subr.bf16.mxu0 0
    %1837 = vmatpush1.bf16.msra.mxu0 %v1824
    %1838 = vmatprep.subr.bf16.mxu0 0
    %1839 = vmatpush1.bf16.msra.mxu0 %v1823
    %1840 = vmatprep.subr.bf16.mxu0 0
    %1841 = vmatpush1.bf16.msra.mxu0 %v1822
    %1842 = vmatprep.subr.bf16.mxu0 0
    %1843 = vmatpush1.bf16.msra.mxu0 %v1821
    %1844 = vmatprep.subr.bf16.mxu0 0
    %1845 = vmatpush1.bf16.msra.mxu0 %v1820
    %1846 = vmatprep.subr.bf16.mxu0 0
    %1847 = vmatpush1.bf16.msra.mxu0 %v1819
    %1848 = vmatprep.subr.bf16.mxu0 0
    %1849 = vmatpush1.bf16.msra.mxu0 %v1818
    %1850 = vmatprep.subr.bf16.mxu0 0
    %1851 = vmatpush2.bf16.msra.mxu0 0
    %1852 = vmatprep.subr.bf16.mxu0 0
    %1853 = vmatpush2.bf16.msra.mxu0 0
    %1854 = vmatprep.subr.bf16.mxu0 0
    %1855 = vmatpush2.bf16.msra.mxu0 0
    %1856 = vmatprep.subr.bf16.mxu0 0
    %1857 = vmatpush2.bf16.msra.mxu0 0
    %1858 = vmatprep.subr.bf16.mxu0 0
    %1859 = vmatpush2.bf16.msra.mxu0 0
    %1860 = vmatprep.subr.bf16.mxu0 0
    %1861 = vmatpush2.bf16.msra.mxu0 0
    %1862 = vmatprep.subr.bf16.mxu0 0
    %1863 = vmatpush2.bf16.msra.mxu0 0
    %1864 = vmatprep.subr.bf16.mxu0 0
    %1865 = vmatpush2.bf16.msra.mxu0 0
    %1866 = vmatprep.mubr.bf16.mxu0 0
    %1867 = vmatmul.mubr.bf16.gmra.mxu0 %v1769
    %v1868 = vpop.f32.mrf.mxu0
    %v1869 = vadd.f32 0.0, %v1868
    %v1870 = vpop.f32.mrf.mxu0
    %v1871 = vpop.f32.mrf.mxu0
    %v1872 = vpop.f32.mrf.mxu0
    %1873 = vdwg.mxu0
    %v1876 = vunpack.c.l.s4 1966171168
    %v1877 = vunpack.c.0.s8 %v1876
    %v1878 = vlaneseq
    %v1879 = vshrl.u32 %v1878, 7
    %v1880 = vsub.s32 %v1877, %v1879
    %v1881 = vrot.slane %v1869, %v1880
    %v1882 = vcombine.high %v1881, %v1881
    %v1884 = vunpack.c.l.s4 1966171168
    %v1885 = vunpack.c.0.s8 %v1884
    %v1886 = vlaneseq
    %v1887 = vshrl.u32 %v1886, 7
    %v1888 = vsub.s32 %v1885, %v1887
    %v1889 = vrot.slane %v1881, %v1888
    %v1891 = vunpack.c.l.s4 1966171168
    %v1892 = vunpack.c.0.s8 %v1891
    %v1893 = vlaneseq
    %v1894 = vshrl.u32 %v1893, 7
    %v1895 = vsub.s32 %v1892, %v1894
    %v1896 = vrot.slane %v1882, %v1895
    %v1897 = vlaneseq
    %v1898 = vshrl.u32 %v1897, 7
    %v1899 = vsub.s32 0, %v1898
    %v1900 = vrot.slane %v1889, %v1899
    %v1901 = vlaneseq
    %v1902 = vshrl.u32 %v1901, 7
    %v1903 = vsub.s32 0, %v1902
    %v1904 = vrot.slane %v1896, %v1903
    %v1907 = vadd.f32 %v1755, %v1900
    %v1908 = vadd.f32 %v1758, %v1900
    %v1909 = vadd.f32 %v1763, %v1904
    %v1910 = vadd.f32 %v1766, %v1904
    %v1911 = vmax.f32 %v1907, 0.0
    %v1912 = vmax.f32 %v1908, 0.0
    %v1913 = vmax.f32 %v1909, 0.0
    %v1914 = vmax.f32 %v1910, 0.0
    %1915 = vst [vmem:[#allocation17] sm:$0xff] %v1911
    %1916 = vst [vmem:[#allocation17 + $0x8] sm:$0xff] %v1912
    %1917 = vst [vmem:[#allocation17 + $0x10] sm:$0xff] %v1913
    %1918 = vst [vmem:[#allocation17 + $0x18] sm:$0xff] %v1914
    // Predicated region
    $region74: #{tpu_custom_call.1} parent=1 // pred_check
      _
    $region75: #{tpu_custom_call.1} parent=1 // pred_check_branch
      %1920 = sbr.rel (0) target = $region77
    $region76: #{tpu_custom_call.1} parent=1 // pred_region
      %s1922 = ssub.s32 512, 512
      %1923 = vsyncadd [#allocation4], %s1922
      %s1924 = sshll.u32 [#allocation17], 4
      %s1925 = int_to_ptr.vmem [resolvable:$true] %s1924
      %1930 = dma.vmem_to_hbm [thread:$0]  %s1925, 512, %s9, [#allocation4], 128, 128, 8
    $region77: #{tpu_custom_call.1} parent=1 // pred_fallthru
      _
    // Predicated region
    $region78: #{tpu_custom_call.1} parent=1 // pred_check
      _
    $region79: #{tpu_custom_call.1} parent=1 // pred_check_branch
      %1932 = sbr.rel (0) target = $region81
    $region80: #{tpu_custom_call.1} parent=1 // pred_region
      %1933 = dma.done [#allocation4], 512
    $region81: #{tpu_custom_call.1} parent=1 // pred_fallthru
      _
    %1934 = vsyncpa [#allocation3], 1
    %1935 = vsyncpa [#allocation6], 1
    %1936 = vsyncpa [#allocation9], 1
    %1937 = vsyncpa [#allocation12], 1
    %1938 = vsyncpa [#allocation15], 1
    %1939 = vsyncpa [#allocation4], 1

</llo_original>
